<compile_context>
chip_gen: v7x
topology: tpu7x:2x2x1
jax: 0.10.0
libtpu: 0.0.40
codegen_flags: <defaults>
</compile_context>

<pallas_src>
import functools

import jax
import jax.numpy as jnp
from jax import lax
from jax.experimental import pallas as pl
from jax.experimental.pallas import tpu as pltpu


def _leaky(x, slope=0.2):
    return jnp.where(x >= 0, x, slope * x)


def _cat(parts, axis):
    return parts[0] if len(parts) == 1 else jnp.concatenate(parts, axis=axis)


def _decoder_kernel(x_ref, w1_ref, w2_ref, w3_ref, w4_ref, w5_ref,
                    u2_ref, u3_ref, u4_ref, u5_ref, o_ref, *, block_b, l_in):
    f32 = jnp.float32
    l1 = l_in + 1
    e = x_ref.shape[2]

    # ---- conv1: ConvTranspose1d(E -> ngf4, k=2, s=1, p=0) + LeakyReLU ------
    # h[m] = x[m] @ W[:,:,0] + x[m-1] @ W[:,:,1]  (out length l_in + 1),
    # written as [x_cur | x_prev] @ vstack(W0, W1); all block_b elements are
    # stacked along rows so the whole block is one MXU dot (in registers, no
    # scratch round-trip).
    zrow_e = jnp.zeros((1, e), f32)
    blocks = []
    for b in range(block_b):
        xb = x_ref[b].astype(f32)                               # (l_in, E)
        x_cur = jnp.concatenate([xb, zrow_e], axis=0)           # (l1, E)
        x_prev = jnp.concatenate([zrow_e, xb], axis=0)          # (l1, E)
        blocks.append(jnp.concatenate([x_cur, x_prev], axis=1))  # (l1, 2E)
    t = _cat(blocks, axis=0)                                    # (Bt*l1, 2E)
    w1 = w1_ref[...]
    h_all = _leaky(jnp.dot(t, w1, preferred_element_type=f32))  # (Bt*l1, ngf4)
    hs = [h_all[b * l1:(b + 1) * l1] for b in range(block_b)]

    # ---- [nearest-upsample x2 ; Conv1d(k=3, s=1, p=1)] stages --------------
    def up_conv(hs, u_ref, w_ref, act):
        length, c_in = hs[0].shape
        m = 2 * length
        u_mat = u_ref[...]                                      # (m, length)
        w_fused = w_ref[...]                                    # (3*C_in, C_out)
        zrow = jnp.zeros((1, c_in), f32)
        taps = []
        for b in range(block_b):
            u = jnp.dot(u_mat, hs[b], preferred_element_type=f32)   # (m, C_in)
            u_prev = jnp.concatenate([zrow, u[:m - 1, :]], axis=0)  # u[n-1], 0-pad
            u_next = jnp.concatenate([u[1:, :], zrow], axis=0)      # u[n+1], 0-pad
            taps.append(jnp.concatenate([u_prev, u, u_next], axis=1))  # (m, 3*C_in)
        t = _cat(taps, axis=0)                                  # (Bt*m, 3*C_in)
        y = act(jnp.dot(t, w_fused, preferred_element_type=f32))   # (Bt*m, C_out)
        return [y[b * m:(b + 1) * m] for b in range(block_b)]

    hs = up_conv(hs, u2_ref, w2_ref, _leaky)
    hs = up_conv(hs, u3_ref, w3_ref, _leaky)
    hs = up_conv(hs, u4_ref, w4_ref, _leaky)
    hs = up_conv(hs, u5_ref, w5_ref, jnp.tanh)

    for b in range(block_b):
        o_ref[b] = hs[b].astype(o_ref.dtype)


def _upsample_matrix(length, dtype):
    # U[r, c] = 1.0 iff c == r // 2  -> nearest-neighbor x2 upsample, (2L, L)
    r = jnp.arange(2 * length, dtype=jnp.int32)[:, None]
    c = jnp.arange(length, dtype=jnp.int32)[None, :]
    return ((r // 2) == c).astype(dtype)


def decoder_forward(x_ncl, params, block_b=None):
    """x_ncl: (B, embed_dim, L_in) PyTorch NCL layout. Returns (B, 2, 16*(L_in+1))."""
    w1_pt, w2_pt, w3_pt, w4_pt, w5_pt = params
    B, E, L_in = x_ncl.shape
    l1 = L_in + 1
    ngf4 = w1_pt.shape[1]
    L_out = 16 * l1
    dt = x_ncl.dtype

    # Batch blocking: amortize grid-step / DMA overhead; keep >= 2 grid blocks
    # (when B > 1) so both v7x TensorCores receive work.
    if block_b is None:
        block_b = min(8, B)
        if B > 1 and pl.cdiv(B, block_b) < 2:
            block_b = (B + 1) // 2
    grid_b = pl.cdiv(B, block_b)
    b_pad = grid_b * block_b

    x = jnp.transpose(x_ncl, (0, 2, 1))                         # (B, L_in, E)
    if b_pad != B:
        x = jnp.concatenate([x, jnp.zeros((b_pad - B, L_in, E), dt)], axis=0)

    # Fused weights: all taps of a conv stacked along the contraction axis.
    # ConvTranspose1d weight is (in, out, k): taps [x[n], x[n-1]].
    w1f = jnp.concatenate([w1_pt[:, :, 0], w1_pt[:, :, 1]], axis=0).astype(dt)

    def fuse_conv(w_pt):   # Conv1d weight (out, in, 3) -> (3*in, out), taps [n-1, n, n+1]
        return jnp.transpose(w_pt, (2, 1, 0)).reshape(
            3 * w_pt.shape[1], w_pt.shape[0]).astype(dt)

    w2f, w3f, w4f, w5f = (fuse_conv(w) for w in (w2_pt, w3_pt, w4_pt, w5_pt))

    # Precomputed nearest-x2 upsample matrices (constant index_map -> loaded
    # once, stay VMEM-resident across grid steps).
    u2 = _upsample_matrix(l1, dt)
    u3 = _upsample_matrix(2 * l1, dt)
    u4 = _upsample_matrix(4 * l1, dt)
    u5 = _upsample_matrix(8 * l1, dt)

    kernel = functools.partial(_decoder_kernel, block_b=block_b, l_in=L_in)
    const2 = lambda i: (0, 0)
    out_nlc = pl.pallas_call(
        kernel,
        out_shape=jax.ShapeDtypeStruct((b_pad, L_out, 2), dt),
        grid_spec=pltpu.PrefetchScalarGridSpec(
            num_scalar_prefetch=0,
            grid=(grid_b,),
            in_specs=[
                pl.BlockSpec((block_b, L_in, E), lambda i: (i, 0, 0)),
                pl.BlockSpec(w1f.shape, const2),
                pl.BlockSpec(w2f.shape, const2),
                pl.BlockSpec(w3f.shape, const2),
                pl.BlockSpec(w4f.shape, const2),
                pl.BlockSpec(w5f.shape, const2),
                pl.BlockSpec(u2.shape, const2),
                pl.BlockSpec(u3.shape, const2),
                pl.BlockSpec(u4.shape, const2),
                pl.BlockSpec(u5.shape, const2),
            ],
            out_specs=pl.BlockSpec((block_b, L_out, 2), lambda i: (i, 0, 0)),
        ),
        compiler_params=pltpu.CompilerParams(
            dimension_semantics=("parallel",)),
    )(x, w1f, w2f, w3f, w4f, w5f, u2, u3, u4, u5)

    out_nlc = out_nlc[:B]
    return jnp.transpose(out_nlc, (0, 2, 1))                    # (B, 2, L_out), NCL


# ------------------------- pure-JAX reference ------------------------------
def decoder_reference(x_ncl, params):
    w1, w2, w3, w4, w5 = params
    B, E, L = x_ncl.shape
    ngf4 = w1.shape[1]

    # ConvTranspose1d(E->ngf4, k=2, s=1, p=0)
    y = jnp.zeros((B, ngf4, L + 1), x_ncl.dtype)
    y = y.at[:, :, 0:L].add(jnp.einsum('bil,io->bol', x_ncl, w1[:, :, 0]))
    y = y.at[:, :, 1:L + 1].add(jnp.einsum('bil,io->bol', x_ncl, w1[:, :, 1]))
    y = _leaky(y)

    def up(z):                                   # nearest x2 along length
        return jnp.repeat(z, 2, axis=-1)

    def conv(z, w):                              # Conv1d k=3, s=1, p=1
        return lax.conv_general_dilated(
            z, w, window_strides=(1,), padding=[(1, 1)],
            dimension_numbers=('NCH', 'OIH', 'NCH'))

    y = _leaky(conv(up(y), w2))
    y = _leaky(conv(up(y), w3))
    y = _leaky(conv(up(y), w4))
    y = jnp.tanh(conv(up(y), w5))
    return y


if __name__ == "__main__":
    def run_case(B, embed_dim, L_in, ngfs):
        ngf1, ngf2, ngf3, ngf4 = ngfs
        ks = jax.random.split(jax.random.PRNGKey(0), 6)

        def init(k, shape, fan):
            bound = 1.0 / (fan ** 0.5)
            return jax.random.uniform(k, shape, jnp.float32, -bound, bound)

        # Parameters in native PyTorch layouts (USE_BIAS = False -> no biases).
        w1 = init(ks[0], (embed_dim, ngf4, 2), embed_dim * 2)   # ConvTranspose1d (in, out, k)
        w2 = init(ks[1], (ngf3, ngf4, 3), ngf4 * 3)             # Conv1d (out, in, k)
        w3 = init(ks[2], (ngf2, ngf3, 3), ngf3 * 3)
        w4 = init(ks[3], (ngf1, ngf2, 3), ngf2 * 3)
        w5 = init(ks[4], (2, ngf1, 3), ngf1 * 3)
        params = (w1, w2, w3, w4, w5)
        x = jax.random.normal(ks[5], (B, embed_dim, L_in), jnp.float32)

        out = jax.block_until_ready(decoder_forward(x, params))
        ref = jax.block_until_ready(decoder_reference(x, params))
        assert out.shape == (B, 2, 16 * (L_in + 1)), out.shape
        err = float(jnp.max(jnp.abs(out - ref)))
        assert err < 1e-3, f"max abs error vs reference: {err}"

    # Case 1: matches the original demo (latent length 1).
    run_case(B=2, embed_dim=32, L_in=1, ngfs=(8, 16, 32, 64))
    # Case 2: exercises batch blocking with padding (B=5 -> block_b=3, grid=2).
    run_case(B=5, embed_dim=16, L_in=3, ngfs=(4, 8, 16, 32))
    print("KERNEL_OK")
</pallas_src>

<mosaic_0001>
module attributes {stable_mosaic.version = 11 : i64} {
  func.func @_decoder_kernel(%arg0: i32, %arg1: memref<1x1x32xf32, #tpu.memory_space<vmem>>, %arg2: memref<64x64xf32, #tpu.memory_space<vmem>>, %arg3: memref<192x32xf32, #tpu.memory_space<vmem>>, %arg4: memref<96x16xf32, #tpu.memory_space<vmem>>, %arg5: memref<48x8xf32, #tpu.memory_space<vmem>>, %arg6: memref<24x2xf32, #tpu.memory_space<vmem>>, %arg7: memref<4x2xf32, #tpu.memory_space<vmem>>, %arg8: memref<8x4xf32, #tpu.memory_space<vmem>>, %arg9: memref<16x8xf32, #tpu.memory_space<vmem>>, %arg10: memref<32x16xf32, #tpu.memory_space<vmem>>, %arg11: memref<1x32x2xf32, #tpu.memory_space<vmem>>) attributes {dimension_semantics = [#tpu.dimension_semantics<parallel>], iteration_bounds = array<i64: 2>, scalar_prefetch = 0 : i64, scratch_operands = 0 : i64, tpu.core_type = #tpu.core_type<tc>, window_params = [{transform_indices = @transform_0, window_bounds = array<i64: 1, 1, 32>}, {pipeline_mode = #tpu.pipeline_mode<synchronous>, transform_indices = @transform_1, window_bounds = array<i64: 64, 64>}, {pipeline_mode = #tpu.pipeline_mode<synchronous>, transform_indices = @transform_2, window_bounds = array<i64: 192, 32>}, {pipeline_mode = #tpu.pipeline_mode<synchronous>, transform_indices = @transform_3, window_bounds = array<i64: 96, 16>}, {pipeline_mode = #tpu.pipeline_mode<synchronous>, transform_indices = @transform_4, window_bounds = array<i64: 48, 8>}, {pipeline_mode = #tpu.pipeline_mode<synchronous>, transform_indices = @transform_5, window_bounds = array<i64: 24, 2>}, {pipeline_mode = #tpu.pipeline_mode<synchronous>, transform_indices = @transform_6, window_bounds = array<i64: 4, 2>}, {pipeline_mode = #tpu.pipeline_mode<synchronous>, transform_indices = @transform_7, window_bounds = array<i64: 8, 4>}, {pipeline_mode = #tpu.pipeline_mode<synchronous>, transform_indices = @transform_8, window_bounds = array<i64: 16, 8>}, {pipeline_mode = #tpu.pipeline_mode<synchronous>, transform_indices = @transform_9, window_bounds = array<i64: 32, 16>}, {transform_indices = @transform_10, window_bounds = array<i64: 1, 32, 2>}]} {
    %cst = arith.constant 0.000000e+00 : f32
    %0 = vector.broadcast %cst : f32 to vector<1x32xf32>
    %c0 = arith.constant 0 : index
    %c0_0 = arith.constant 0 : index
    %c0_1 = arith.constant 0 : index
    %1 = vector.load %arg1[%c0, %c0_0, %c0_1] : memref<1x1x32xf32, #tpu.memory_space<vmem>>, vector<1x1x32xf32>
    %2 = vector.shape_cast %1 : vector<1x1x32xf32> to vector<1x32xf32>
    %3 = tpu.concatenate %2, %0 in 0 : vector<1x32xf32>, vector<1x32xf32> -> vector<2x32xf32>
    %4 = tpu.concatenate %0, %2 in 0 : vector<1x32xf32>, vector<1x32xf32> -> vector<2x32xf32>
    %5 = tpu.concatenate %3, %4 in 1 : vector<2x32xf32>, vector<2x32xf32> -> vector<2x64xf32>
    %c0_2 = arith.constant 0 : index
    %c0_3 = arith.constant 0 : index
    %6 = vector.load %arg2[%c0_2, %c0_3] : memref<64x64xf32, #tpu.memory_space<vmem>>, vector<64x64xf32>
    %cst_4 = arith.constant dense<0.000000e+00> : vector<2x64xf32>
    %7 = tpu.matmul %5, %6, %cst_4 {dimension_numbers = #tpu.dot_dimension_numbers<[1], [0], [0], [1], [0, 0, 1, 1], [], []>} : vector<2x64xf32>, vector<64x64xf32>, vector<2x64xf32> -> vector<2x64xf32>
    %cst_5 = arith.constant 0.000000e+00 : f32
    %8 = vector.broadcast %cst_5 : f32 to vector<2x64xf32>
    %9 = arith.cmpf oge, %7, %8 : vector<2x64xf32>
    %cst_6 = arith.constant 2.000000e-01 : f32
    %10 = vector.broadcast %cst_6 : f32 to vector<2x64xf32>
    %11 = arith.mulf %10, %7 : vector<2x64xf32>
    %12 = arith.select %9, %7, %11 : vector<2x64xi1>, vector<2x64xf32>
    %c0_7 = arith.constant 0 : index
    %c0_8 = arith.constant 0 : index
    %13 = vector.load %arg7[%c0_7, %c0_8] : memref<4x2xf32, #tpu.memory_space<vmem>>, vector<4x2xf32>
    %c0_9 = arith.constant 0 : index
    %c0_10 = arith.constant 0 : index
    %14 = vector.load %arg3[%c0_9, %c0_10] : memref<192x32xf32, #tpu.memory_space<vmem>>, vector<192x32xf32>
    %cst_11 = arith.constant 0.000000e+00 : f32
    %15 = vector.broadcast %cst_11 : f32 to vector<1x64xf32>
    %cst_12 = arith.constant dense<0.000000e+00> : vector<4x64xf32>
    %16 = tpu.matmul %13, %12, %cst_12 {dimension_numbers = #tpu.dot_dimension_numbers<[1], [0], [0], [1], [0, 0, 1, 1], [], []>} : vector<4x2xf32>, vector<2x64xf32>, vector<4x64xf32> -> vector<4x64xf32>
    %17 = vector.extract_strided_slice %16 {offsets = [0, 0], sizes = [3, 64], strides = [1, 1]} : vector<4x64xf32> to vector<3x64xf32>
    %18 = tpu.concatenate %15, %17 in 0 : vector<1x64xf32>, vector<3x64xf32> -> vector<4x64xf32>
    %19 = vector.extract_strided_slice %16 {offsets = [1, 0], sizes = [3, 64], strides = [1, 1]} : vector<4x64xf32> to vector<3x64xf32>
    %20 = tpu.concatenate %19, %15 in 0 : vector<3x64xf32>, vector<1x64xf32> -> vector<4x64xf32>
    %21 = tpu.concatenate %18, %16, %20 in 1 : vector<4x64xf32>, vector<4x64xf32>, vector<4x64xf32> -> vector<4x192xf32>
    %cst_13 = arith.constant dense<0.000000e+00> : vector<4x32xf32>
    %22 = tpu.matmul %21, %14, %cst_13 {dimension_numbers = #tpu.dot_dimension_numbers<[1], [0], [0], [1], [0, 0, 1, 1], [], []>} : vector<4x192xf32>, vector<192x32xf32>, vector<4x32xf32> -> vector<4x32xf32>
    %cst_14 = arith.constant 0.000000e+00 : f32
    %23 = vector.broadcast %cst_14 : f32 to vector<4x32xf32>
    %24 = arith.cmpf oge, %22, %23 : vector<4x32xf32>
    %cst_15 = arith.constant 2.000000e-01 : f32
    %25 = vector.broadcast %cst_15 : f32 to vector<4x32xf32>
    %26 = arith.mulf %25, %22 : vector<4x32xf32>
    %27 = arith.select %24, %22, %26 : vector<4x32xi1>, vector<4x32xf32>
    %c0_16 = arith.constant 0 : index
    %c0_17 = arith.constant 0 : index
    %28 = vector.load %arg8[%c0_16, %c0_17] : memref<8x4xf32, #tpu.memory_space<vmem>>, vector<8x4xf32>
    %c0_18 = arith.constant 0 : index
    %c0_19 = arith.constant 0 : index
    %29 = vector.load %arg4[%c0_18, %c0_19] : memref<96x16xf32, #tpu.memory_space<vmem>>, vector<96x16xf32>
    %cst_20 = arith.constant 0.000000e+00 : f32
    %30 = vector.broadcast %cst_20 : f32 to vector<1x32xf32>
    %cst_21 = arith.constant dense<0.000000e+00> : vector<8x32xf32>
    %31 = tpu.matmul %28, %27, %cst_21 {dimension_numbers = #tpu.dot_dimension_numbers<[1], [0], [0], [1], [0, 0, 1, 1], [], []>} : vector<8x4xf32>, vector<4x32xf32>, vector<8x32xf32> -> vector<8x32xf32>
    %32 = vector.extract_strided_slice %31 {offsets = [0, 0], sizes = [7, 32], strides = [1, 1]} : vector<8x32xf32> to vector<7x32xf32>
    %33 = tpu.concatenate %30, %32 in 0 : vector<1x32xf32>, vector<7x32xf32> -> vector<8x32xf32>
    %34 = vector.extract_strided_slice %31 {offsets = [1, 0], sizes = [7, 32], strides = [1, 1]} : vector<8x32xf32> to vector<7x32xf32>
    %35 = tpu.concatenate %34, %30 in 0 : vector<7x32xf32>, vector<1x32xf32> -> vector<8x32xf32>
    %36 = tpu.concatenate %33, %31, %35 in 1 : vector<8x32xf32>, vector<8x32xf32>, vector<8x32xf32> -> vector<8x96xf32>
    %cst_22 = arith.constant dense<0.000000e+00> : vector<8x16xf32>
    %37 = tpu.matmul %36, %29, %cst_22 {dimension_numbers = #tpu.dot_dimension_numbers<[1], [0], [0], [1], [0, 0, 1, 1], [], []>} : vector<8x96xf32>, vector<96x16xf32>, vector<8x16xf32> -> vector<8x16xf32>
    %cst_23 = arith.constant 0.000000e+00 : f32
    %38 = vector.broadcast %cst_23 : f32 to vector<8x16xf32>
    %39 = arith.cmpf oge, %37, %38 : vector<8x16xf32>
    %cst_24 = arith.constant 2.000000e-01 : f32
    %40 = vector.broadcast %cst_24 : f32 to vector<8x16xf32>
    %41 = arith.mulf %40, %37 : vector<8x16xf32>
    %42 = arith.select %39, %37, %41 : vector<8x16xi1>, vector<8x16xf32>
    %c0_25 = arith.constant 0 : index
    %c0_26 = arith.constant 0 : index
    %43 = vector.load %arg9[%c0_25, %c0_26] : memref<16x8xf32, #tpu.memory_space<vmem>>, vector<16x8xf32>
    %c0_27 = arith.constant 0 : index
    %c0_28 = arith.constant 0 : index
    %44 = vector.load %arg5[%c0_27, %c0_28] : memref<48x8xf32, #tpu.memory_space<vmem>>, vector<48x8xf32>
    %cst_29 = arith.constant 0.000000e+00 : f32
    %45 = vector.broadcast %cst_29 : f32 to vector<1x16xf32>
    %cst_30 = arith.constant dense<0.000000e+00> : vector<16x16xf32>
    %46 = tpu.matmul %43, %42, %cst_30 {dimension_numbers = #tpu.dot_dimension_numbers<[1], [0], [0], [1], [0, 0, 1, 1], [], []>} : vector<16x8xf32>, vector<8x16xf32>, vector<16x16xf32> -> vector<16x16xf32>
    %47 = vector.extract_strided_slice %46 {offsets = [0, 0], sizes = [15, 16], strides = [1, 1]} : vector<16x16xf32> to vector<15x16xf32>
    %48 = tpu.concatenate %45, %47 in 0 : vector<1x16xf32>, vector<15x16xf32> -> vector<16x16xf32>
    %49 = vector.extract_strided_slice %46 {offsets = [1, 0], sizes = [15, 16], strides = [1, 1]} : vector<16x16xf32> to vector<15x16xf32>
    %50 = tpu.concatenate %49, %45 in 0 : vector<15x16xf32>, vector<1x16xf32> -> vector<16x16xf32>
    %51 = tpu.concatenate %48, %46, %50 in 1 : vector<16x16xf32>, vector<16x16xf32>, vector<16x16xf32> -> vector<16x48xf32>
    %cst_31 = arith.constant dense<0.000000e+00> : vector<16x8xf32>
    %52 = tpu.matmul %51, %44, %cst_31 {dimension_numbers = #tpu.dot_dimension_numbers<[1], [0], [0], [1], [0, 0, 1, 1], [], []>} : vector<16x48xf32>, vector<48x8xf32>, vector<16x8xf32> -> vector<16x8xf32>
    %cst_32 = arith.constant 0.000000e+00 : f32
    %53 = vector.broadcast %cst_32 : f32 to vector<16x8xf32>
    %54 = arith.cmpf oge, %52, %53 : vector<16x8xf32>
    %cst_33 = arith.constant 2.000000e-01 : f32
    %55 = vector.broadcast %cst_33 : f32 to vector<16x8xf32>
    %56 = arith.mulf %55, %52 : vector<16x8xf32>
    %57 = arith.select %54, %52, %56 : vector<16x8xi1>, vector<16x8xf32>
    %c0_34 = arith.constant 0 : index
    %c0_35 = arith.constant 0 : index
    %58 = vector.load %arg10[%c0_34, %c0_35] : memref<32x16xf32, #tpu.memory_space<vmem>>, vector<32x16xf32>
    %c0_36 = arith.constant 0 : index
    %c0_37 = arith.constant 0 : index
    %59 = vector.load %arg6[%c0_36, %c0_37] : memref<24x2xf32, #tpu.memory_space<vmem>>, vector<24x2xf32>
    %cst_38 = arith.constant 0.000000e+00 : f32
    %60 = vector.broadcast %cst_38 : f32 to vector<1x8xf32>
    %cst_39 = arith.constant dense<0.000000e+00> : vector<32x8xf32>
    %61 = tpu.matmul %58, %57, %cst_39 {dimension_numbers = #tpu.dot_dimension_numbers<[1], [0], [0], [1], [0, 0, 1, 1], [], []>} : vector<32x16xf32>, vector<16x8xf32>, vector<32x8xf32> -> vector<32x8xf32>
    %62 = vector.extract_strided_slice %61 {offsets = [0, 0], sizes = [31, 8], strides = [1, 1]} : vector<32x8xf32> to vector<31x8xf32>
    %63 = tpu.concatenate %60, %62 in 0 : vector<1x8xf32>, vector<31x8xf32> -> vector<32x8xf32>
    %64 = vector.extract_strided_slice %61 {offsets = [1, 0], sizes = [31, 8], strides = [1, 1]} : vector<32x8xf32> to vector<31x8xf32>
    %65 = tpu.concatenate %64, %60 in 0 : vector<31x8xf32>, vector<1x8xf32> -> vector<32x8xf32>
    %66 = tpu.concatenate %63, %61, %65 in 1 : vector<32x8xf32>, vector<32x8xf32>, vector<32x8xf32> -> vector<32x24xf32>
    %cst_40 = arith.constant dense<0.000000e+00> : vector<32x2xf32>
    %67 = tpu.matmul %66, %59, %cst_40 {dimension_numbers = #tpu.dot_dimension_numbers<[1], [0], [0], [1], [0, 0, 1, 1], [], []>} : vector<32x24xf32>, vector<24x2xf32>, vector<32x2xf32> -> vector<32x2xf32>
    %68 = math.tanh %67 : vector<32x2xf32>
    %c0_41 = arith.constant 0 : index
    %c0_42 = arith.constant 0 : index
    %c0_43 = arith.constant 0 : index
    %69 = vector.load %arg11[%c0_41, %c0_42, %c0_43] : memref<1x32x2xf32, #tpu.memory_space<vmem>>, vector<1x32x2xf32>
    %70 = vector.shape_cast %69 : vector<1x32x2xf32> to vector<32x2xf32>
    %71 = vector.shape_cast %68 : vector<32x2xf32> to vector<1x32x2xf32>
    tpu.vector_store %arg11[%c0_41, %c0_42, %c0_43], %71 {strides = array<i32>} : memref<1x32x2xf32, #tpu.memory_space<vmem>>, vector<1x32x2xf32>,
    return
  }
  func.func @transform_0(%arg0: i32) -> (i32, i32, i32) {
    %c0_i32 = arith.constant 0 : i32
    %c0_i32_0 = arith.constant 0 : i32
    %c0_i32_1 = arith.constant 0 : i32
    return %arg0, %c0_i32, %c0_i32_0 : i32, i32, i32
  }
  func.func @transform_1(%arg0: i32) -> (i32, i32) {
    %c0_i32 = arith.constant 0 : i32
    %c0_i32_0 = arith.constant 0 : i32
    %c0_i32_1 = arith.constant 0 : i32
    return %c0_i32, %c0_i32_0 : i32, i32
  }
  func.func @transform_2(%arg0: i32) -> (i32, i32) {
    %c0_i32 = arith.constant 0 : i32
    %c0_i32_0 = arith.constant 0 : i32
    %c0_i32_1 = arith.constant 0 : i32
    return %c0_i32, %c0_i32_0 : i32, i32
  }
  func.func @transform_3(%arg0: i32) -> (i32, i32) {
    %c0_i32 = arith.constant 0 : i32
    %c0_i32_0 = arith.constant 0 : i32
    %c0_i32_1 = arith.constant 0 : i32
    return %c0_i32, %c0_i32_0 : i32, i32
  }
  func.func @transform_4(%arg0: i32) -> (i32, i32) {
    %c0_i32 = arith.constant 0 : i32
    %c0_i32_0 = arith.constant 0 : i32
    %c0_i32_1 = arith.constant 0 : i32
    return %c0_i32, %c0_i32_0 : i32, i32
  }
  func.func @transform_5(%arg0: i32) -> (i32, i32) {
    %c0_i32 = arith.constant 0 : i32
    %c0_i32_0 = arith.constant 0 : i32
    %c0_i32_1 = arith.constant 0 : i32
    return %c0_i32, %c0_i32_0 : i32, i32
  }
  func.func @transform_6(%arg0: i32) -> (i32, i32) {
    %c0_i32 = arith.constant 0 : i32
    %c0_i32_0 = arith.constant 0 : i32
    %c0_i32_1 = arith.constant 0 : i32
    return %c0_i32, %c0_i32_0 : i32, i32
  }
  func.func @transform_7(%arg0: i32) -> (i32, i32) {
    %c0_i32 = arith.constant 0 : i32
    %c0_i32_0 = arith.constant 0 : i32
    %c0_i32_1 = arith.constant 0 : i32
    return %c0_i32, %c0_i32_0 : i32, i32
  }
  func.func @transform_8(%arg0: i32) -> (i32, i32) {
    %c0_i32 = arith.constant 0 : i32
    %c0_i32_0 = arith.constant 0 : i32
    %c0_i32_1 = arith.constant 0 : i32
    return %c0_i32, %c0_i32_0 : i32, i32
  }
  func.func @transform_9(%arg0: i32) -> (i32, i32) {
    %c0_i32 = arith.constant 0 : i32
    %c0_i32_0 = arith.constant 0 : i32
    %c0_i32_1 = arith.constant 0 : i32
    return %c0_i32, %c0_i32_0 : i32, i32
  }
  func.func @transform_10(%arg0: i32) -> (i32, i32, i32) {
    %c0_i32 = arith.constant 0 : i32
    %c0_i32_0 = arith.constant 0 : i32
    %c0_i32_1 = arith.constant 0 : i32
    return %arg0, %c0_i32, %c0_i32_0 : i32, i32, i32
  }
}

</mosaic_0001>

<llo_original>
// kernel: tpu_custom_call.1
$region0: #{tpu_custom_call.1}
  #allocation0 [shape = 'u32[]', space=smem, size = 0x4, offset = 0x4, fixed_abs, tag = 'smem constant byte address 0x4 - core index']
  #allocation1 [shape = 'u32[144,128]{1,0:T(1,128)}', space=vmem, size = 0x12000, scoped, tag = 'internal scratch']
  %s0 = inlined_call_operand.vmem [shape: f32[2,1,32], index: 0, kind: input, shape index: {}]
  %s1 = inlined_call_operand.vmem [shape: f32[64,64], index: 1, kind: input, shape index: {}]
  %s2 = inlined_call_operand.vmem [shape: f32[192,32], index: 2, kind: input, shape index: {}]
  %s3 = inlined_call_operand.vmem [shape: f32[96,16], index: 3, kind: input, shape index: {}]
  %s4 = inlined_call_operand.vmem [shape: f32[48,8], index: 4, kind: input, shape index: {}]
  %s5 = inlined_call_operand.vmem [shape: f32[24,2], index: 5, kind: input, shape index: {}]
  %s6 = inlined_call_operand.vmem [shape: f32[4,2], index: 6, kind: input, shape index: {}]
  %s7 = inlined_call_operand.vmem [shape: f32[8,4], index: 7, kind: input, shape index: {}]
  %s8 = inlined_call_operand.vmem [shape: f32[16,8], index: 8, kind: input, shape index: {}]
  %s9 = inlined_call_operand.vmem [shape: f32[32,16], index: 9, kind: input, shape index: {}]
  %s10 = inlined_call_operand.vmem [shape: f32[2,32,2], index: 10, kind: output, shape index: {}]
  %s11 = sld [smem:[#allocation0]]
  $region73: #{tpu_custom_call.1} parent=0
    _
  %s13 = ssub.s32 1, %s11
  %s14 = scalar_select 0, %s13, %s11
  loop: start=0, step=1, limit=4
  $region2: #{tpu_custom_call.1} parent=0 // loop_pre_header
    _
  $region3: #{tpu_custom_call.1} parent=0 // loop_header
    %s16 = sphi 0, %s20
    %p17 = scmp.ge.s32.totalorder %s16, 4
    %s26 = sphi 0, %s28
    %s29 = sphi 0, %s26
    %s30 = sphi 0, %s29
    %s46 = sphi 0, %s30
    %s50 = sphi 0, %s50
    %s52 = sphi 0, %s50
    %s53 = sphi 0, %s52
    %s67 = sphi 0, %s53
    %s71 = sphi 0, %s71
    %s73 = sphi 0, %s71
    %s74 = sphi 0, %s73
    %s88 = sphi 0, %s74
    %s92 = sphi 0, %s92
    %s94 = sphi 0, %s92
    %s95 = sphi 0, %s94
    %s109 = sphi 0, %s95
    %s113 = sphi 0, %s113
    %s115 = sphi 0, %s113
    %s116 = sphi 0, %s115
    %s130 = sphi 0, %s116
    %s134 = sphi 0, %s134
    %s136 = sphi 0, %s134
    %s137 = sphi 0, %s136
    %s151 = sphi 0, %s137
    %s155 = sphi 0, %s155
    %s157 = sphi 0, %s155
    %s158 = sphi 0, %s157
    %s172 = sphi 0, %s158
    %s176 = sphi 0, %s176
    %s178 = sphi 0, %s176
    %s179 = sphi 0, %s178
    %s193 = sphi 0, %s179
    %s197 = sphi 0, %s197
    %s199 = sphi 0, %s197
    %s200 = sphi 0, %s199
    %s214 = sphi 0, %s200
    %s218 = sphi 0, %s218
    %s220 = sphi 0, %s218
    %s221 = sphi 0, %s220
    %s235 = sphi 0, %s221
    %s241 = sphi 0, %s243
    %s244 = sphi 0, %s241
    %s245 = sphi 0, %s244
    %s261 = sphi 0, %s245
  $region4: #{tpu_custom_call.1} parent=0 // loop_header_branch
    %19 = sbr.rel (%p17) target = $region8
  $region5: #{tpu_custom_call.1} parent=0 // loop_body
    %s21 = ssub.s32 %s16, 1
    %s22 = ssub.s32 %s16, 2
    %s23 = sadd.s32 %s16, 1
    %s24 = ssub.s32 %s16, %s23
    %p25 = scmp.eq.s32.totalorder %s24, 0
    %s27 = sadd.s32 %s26, 1
    %s28 = scalar_select %p25, %s26, %s27
    %p31 = pneg %p25
    %p32 = scmp.eq.s32.totalorder %s16, 1
    %p33 = por %p31, %p32
    %p34 = scmp.ne.s32.totalorder %s26, %s29
    %p35 = scmp.eq.s32.totalorder %s16, 0
    %p36 = por %p34, %p35
    %p37 = scmp.ne.s32.totalorder %s26, %s29
    %p38 = scmp.eq.s32.totalorder %s21, 1
    %p39 = por %p37, %p38
    %p40 = scmp.ne.s32.totalorder %s29, %s30
    %p41 = scmp.eq.s32.totalorder %s21, 0
    %p42 = por %p40, %p41
    %p43 = scmp.ne.s32.totalorder %s29, %s30
    %p44 = scmp.eq.s32.totalorder %s22, 1
    %p45 = por %p43, %p44
    %p47 = scmp.ne.s32.totalorder %s30, %s46
    %p48 = scmp.eq.s32.totalorder %s22, 0
    %p49 = por %p47, %p48
    %s51 = sadd.s32 %s50, 1
    %p54 = scmp.eq.s32.totalorder %s16, 1
    %p55 = scmp.ne.s32.totalorder %s50, %s52
    %p56 = scmp.eq.s32.totalorder %s16, 0
    %p57 = por %p55, %p56
    %p58 = scmp.ne.s32.totalorder %s50, %s52
    %p59 = scmp.eq.s32.totalorder %s21, 1
    %p60 = por %p58, %p59
    %p61 = scmp.ne.s32.totalorder %s52, %s53
    %p62 = scmp.eq.s32.totalorder %s21, 0
    %p63 = por %p61, %p62
    %p64 = scmp.ne.s32.totalorder %s52, %s53
    %p65 = scmp.eq.s32.totalorder %s22, 1
    %p66 = por %p64, %p65
    %p68 = scmp.ne.s32.totalorder %s53, %s67
    %p69 = scmp.eq.s32.totalorder %s22, 0
    %p70 = por %p68, %p69
    %s72 = sadd.s32 %s71, 1
    %p75 = scmp.eq.s32.totalorder %s16, 1
    %p76 = scmp.ne.s32.totalorder %s71, %s73
    %p77 = scmp.eq.s32.totalorder %s16, 0
    %p78 = por %p76, %p77
    %p79 = scmp.ne.s32.totalorder %s71, %s73
    %p80 = scmp.eq.s32.totalorder %s21, 1
    %p81 = por %p79, %p80
    %p82 = scmp.ne.s32.totalorder %s73, %s74
    %p83 = scmp.eq.s32.totalorder %s21, 0
    %p84 = por %p82, %p83
    %p85 = scmp.ne.s32.totalorder %s73, %s74
    %p86 = scmp.eq.s32.totalorder %s22, 1
    %p87 = por %p85, %p86
    %p89 = scmp.ne.s32.totalorder %s74, %s88
    %p90 = scmp.eq.s32.totalorder %s22, 0
    %p91 = por %p89, %p90
    %s93 = sadd.s32 %s92, 1
    %p96 = scmp.eq.s32.totalorder %s16, 1
    %p97 = scmp.ne.s32.totalorder %s92, %s94
    %p98 = scmp.eq.s32.totalorder %s16, 0
    %p99 = por %p97, %p98
    %p100 = scmp.ne.s32.totalorder %s92, %s94
    %p101 = scmp.eq.s32.totalorder %s21, 1
    %p102 = por %p100, %p101
    %p103 = scmp.ne.s32.totalorder %s94, %s95
    %p104 = scmp.eq.s32.totalorder %s21, 0
    %p105 = por %p103, %p104
    %p106 = scmp.ne.s32.totalorder %s94, %s95
    %p107 = scmp.eq.s32.totalorder %s22, 1
    %p108 = por %p106, %p107
    %p110 = scmp.ne.s32.totalorder %s95, %s109
    %p111 = scmp.eq.s32.totalorder %s22, 0
    %p112 = por %p110, %p111
    %s114 = sadd.s32 %s113, 1
    %p117 = scmp.eq.s32.totalorder %s16, 1
    %p118 = scmp.ne.s32.totalorder %s113, %s115
    %p119 = scmp.eq.s32.totalorder %s16, 0
    %p120 = por %p118, %p119
    %p121 = scmp.ne.s32.totalorder %s113, %s115
    %p122 = scmp.eq.s32.totalorder %s21, 1
    %p123 = por %p121, %p122
    %p124 = scmp.ne.s32.totalorder %s115, %s116
    %p125 = scmp.eq.s32.totalorder %s21, 0
    %p126 = por %p124, %p125
    %p127 = scmp.ne.s32.totalorder %s115, %s116
    %p128 = scmp.eq.s32.totalorder %s22, 1
    %p129 = por %p127, %p128
    %p131 = scmp.ne.s32.totalorder %s116, %s130
    %p132 = scmp.eq.s32.totalorder %s22, 0
    %p133 = por %p131, %p132
    %s135 = sadd.s32 %s134, 1
    %p138 = scmp.eq.s32.totalorder %s16, 1
    %p139 = scmp.ne.s32.totalorder %s134, %s136
    %p140 = scmp.eq.s32.totalorder %s16, 0
    %p141 = por %p139, %p140
    %p142 = scmp.ne.s32.totalorder %s134, %s136
    %p143 = scmp.eq.s32.totalorder %s21, 1
    %p144 = por %p142, %p143
    %p145 = scmp.ne.s32.totalorder %s136, %s137
    %p146 = scmp.eq.s32.totalorder %s21, 0
    %p147 = por %p145, %p146
    %p148 = scmp.ne.s32.totalorder %s136, %s137
    %p149 = scmp.eq.s32.totalorder %s22, 1
    %p150 = por %p148, %p149
    %p152 = scmp.ne.s32.totalorder %s137, %s151
    %p153 = scmp.eq.s32.totalorder %s22, 0
    %p154 = por %p152, %p153
    %s156 = sadd.s32 %s155, 1
    %p159 = scmp.eq.s32.totalorder %s16, 1
    %p160 = scmp.ne.s32.totalorder %s155, %s157
    %p161 = scmp.eq.s32.totalorder %s16, 0
    %p162 = por %p160, %p161
    %p163 = scmp.ne.s32.totalorder %s155, %s157
    %p164 = scmp.eq.s32.totalorder %s21, 1
    %p165 = por %p163, %p164
    %p166 = scmp.ne.s32.totalorder %s157, %s158
    %p167 = scmp.eq.s32.totalorder %s21, 0
    %p168 = por %p166, %p167
    %p169 = scmp.ne.s32.totalorder %s157, %s158
    %p170 = scmp.eq.s32.totalorder %s22, 1
    %p171 = por %p169, %p170
    %p173 = scmp.ne.s32.totalorder %s158, %s172
    %p174 = scmp.eq.s32.totalorder %s22, 0
    %p175 = por %p173, %p174
    %s177 = sadd.s32 %s176, 1
    %p180 = scmp.eq.s32.totalorder %s16, 1
    %p181 = scmp.ne.s32.totalorder %s176, %s178
    %p182 = scmp.eq.s32.totalorder %s16, 0
    %p183 = por %p181, %p182
    %p184 = scmp.ne.s32.totalorder %s176, %s178
    %p185 = scmp.eq.s32.totalorder %s21, 1
    %p186 = por %p184, %p185
    %p187 = scmp.ne.s32.totalorder %s178, %s179
    %p188 = scmp.eq.s32.totalorder %s21, 0
    %p189 = por %p187, %p188
    %p190 = scmp.ne.s32.totalorder %s178, %s179
    %p191 = scmp.eq.s32.totalorder %s22, 1
    %p192 = por %p190, %p191
    %p194 = scmp.ne.s32.totalorder %s179, %s193
    %p195 = scmp.eq.s32.totalorder %s22, 0
    %p196 = por %p194, %p195
    %s198 = sadd.s32 %s197, 1
    %p201 = scmp.eq.s32.totalorder %s16, 1
    %p202 = scmp.ne.s32.totalorder %s197, %s199
    %p203 = scmp.eq.s32.totalorder %s16, 0
    %p204 = por %p202, %p203
    %p205 = scmp.ne.s32.totalorder %s197, %s199
    %p206 = scmp.eq.s32.totalorder %s21, 1
    %p207 = por %p205, %p206
    %p208 = scmp.ne.s32.totalorder %s199, %s200
    %p209 = scmp.eq.s32.totalorder %s21, 0
    %p210 = por %p208, %p209
    %p211 = scmp.ne.s32.totalorder %s199, %s200
    %p212 = scmp.eq.s32.totalorder %s22, 1
    %p213 = por %p211, %p212
    %p215 = scmp.ne.s32.totalorder %s200, %s214
    %p216 = scmp.eq.s32.totalorder %s22, 0
    %p217 = por %p215, %p216
    %s219 = sadd.s32 %s218, 1
    %p222 = scmp.eq.s32.totalorder %s16, 1
    %p223 = scmp.ne.s32.totalorder %s218, %s220
    %p224 = scmp.eq.s32.totalorder %s16, 0
    %p225 = por %p223, %p224
    %p226 = scmp.ne.s32.totalorder %s218, %s220
    %p227 = scmp.eq.s32.totalorder %s21, 1
    %p228 = por %p226, %p227
    %p229 = scmp.ne.s32.totalorder %s220, %s221
    %p230 = scmp.eq.s32.totalorder %s21, 0
    %p231 = por %p229, %p230
    %p232 = scmp.ne.s32.totalorder %s220, %s221
    %p233 = scmp.eq.s32.totalorder %s22, 1
    %p234 = por %p232, %p233
    %p236 = scmp.ne.s32.totalorder %s221, %s235
    %p237 = scmp.eq.s32.totalorder %s22, 0
    %p238 = por %p236, %p237
    %s239 = ssub.s32 %s16, %s23
    %p240 = scmp.eq.s32.totalorder %s239, 0
    %s242 = sadd.s32 %s241, 1
    %s243 = scalar_select %p240, %s241, %s242
    %p246 = pneg %p240
    %p247 = scmp.eq.s32.totalorder %s16, 1
    %p248 = por %p246, %p247
    %p249 = scmp.ne.s32.totalorder %s241, %s244
    %p250 = scmp.eq.s32.totalorder %s16, 0
    %p251 = por %p249, %p250
    %p252 = scmp.ne.s32.totalorder %s241, %s244
    %p253 = scmp.eq.s32.totalorder %s21, 1
    %p254 = por %p252, %p253
    %p255 = scmp.ne.s32.totalorder %s244, %s245
    %p256 = scmp.eq.s32.totalorder %s21, 0
    %p257 = por %p255, %p256
    %p258 = scmp.ne.s32.totalorder %s244, %s245
    %p259 = scmp.eq.s32.totalorder %s22, 1
    %p260 = por %p258, %p259
    %p262 = scmp.ne.s32.totalorder %s245, %s261
    %p263 = scmp.eq.s32.totalorder %s22, 0
    %p264 = por %p262, %p263
    %p265 = scmp.le.s32.totalorder 1, %s16
    %p266 = scmp.lt.s32.totalorder %s16, 3
    %p267 = pnand %p265, %p266
    %p268 = pneg %p267
    // Predicated region
    $region9: #{tpu_custom_call.1} parent=5 // pred_check
      _
    $region10: #{tpu_custom_call.1} parent=5 // pred_check_branch
      %270 = sbr.rel (%p267) target = $region12
    $region11: #{tpu_custom_call.1} parent=5 // pred_region
      %s271 = ssub.s32 %s16, 1
      // Predicated region
      $region13: #{tpu_custom_call.1} parent=11 // pred_check
        %p272 = pneg %p63
      $region14: #{tpu_custom_call.1} parent=11 // pred_check_branch
        %274 = sbr.rel (%p272) target = $region16
      $region15: #{tpu_custom_call.1} parent=11 // pred_region
        _
      $region16: #{tpu_custom_call.1} parent=11 // pred_fallthru
        _
      // Predicated region
      $region17: #{tpu_custom_call.1} parent=11 // pred_check
        %p275 = pneg %p84
      $region18: #{tpu_custom_call.1} parent=11 // pred_check_branch
        %277 = sbr.rel (%p275) target = $region20
      $region19: #{tpu_custom_call.1} parent=11 // pred_region
        _
      $region20: #{tpu_custom_call.1} parent=11 // pred_fallthru
        _
      // Predicated region
      $region21: #{tpu_custom_call.1} parent=11 // pred_check
        %p278 = pneg %p105
      $region22: #{tpu_custom_call.1} parent=11 // pred_check_branch
        %280 = sbr.rel (%p278) target = $region24
      $region23: #{tpu_custom_call.1} parent=11 // pred_region
        _
      $region24: #{tpu_custom_call.1} parent=11 // pred_fallthru
        _
      // Predicated region
      $region25: #{tpu_custom_call.1} parent=11 // pred_check
        %p281 = pneg %p126
      $region26: #{tpu_custom_call.1} parent=11 // pred_check_branch
        %283 = sbr.rel (%p281) target = $region28
      $region27: #{tpu_custom_call.1} parent=11 // pred_region
        _
      $region28: #{tpu_custom_call.1} parent=11 // pred_fallthru
        _
      // Predicated region
      $region29: #{tpu_custom_call.1} parent=11 // pred_check
        %p284 = pneg %p147
      $region30: #{tpu_custom_call.1} parent=11 // pred_check_branch
        %286 = sbr.rel (%p284) target = $region32
      $region31: #{tpu_custom_call.1} parent=11 // pred_region
        _
      $region32: #{tpu_custom_call.1} parent=11 // pred_fallthru
        _
      // Predicated region
      $region33: #{tpu_custom_call.1} parent=11 // pred_check
        %p287 = pneg %p168
      $region34: #{tpu_custom_call.1} parent=11 // pred_check_branch
        %289 = sbr.rel (%p287) target = $region36
      $region35: #{tpu_custom_call.1} parent=11 // pred_region
        _
      $region36: #{tpu_custom_call.1} parent=11 // pred_fallthru
        _
      // Predicated region
      $region37: #{tpu_custom_call.1} parent=11 // pred_check
        %p290 = pneg %p189
      $region38: #{tpu_custom_call.1} parent=11 // pred_check_branch
        %292 = sbr.rel (%p290) target = $region40
      $region39: #{tpu_custom_call.1} parent=11 // pred_region
        _
      $region40: #{tpu_custom_call.1} parent=11 // pred_fallthru
        _
      // Predicated region
      $region41: #{tpu_custom_call.1} parent=11 // pred_check
        %p293 = pneg %p210
      $region42: #{tpu_custom_call.1} parent=11 // pred_check_branch
        %295 = sbr.rel (%p293) target = $region44
      $region43: #{tpu_custom_call.1} parent=11 // pred_region
        _
      $region44: #{tpu_custom_call.1} parent=11 // pred_fallthru
        _
      // Predicated region
      $region45: #{tpu_custom_call.1} parent=11 // pred_check
        %p296 = pneg %p231
      $region46: #{tpu_custom_call.1} parent=11 // pred_check_branch
        %298 = sbr.rel (%p296) target = $region48
      $region47: #{tpu_custom_call.1} parent=11 // pred_region
        _
      $region48: #{tpu_custom_call.1} parent=11 // pred_fallthru
        _
    $region12: #{tpu_custom_call.1} parent=5 // pred_fallthru
      _
    %p299 = scmp.lt.s32.totalorder %s16, 2
    // Predicated region
    $region49: #{tpu_custom_call.1} parent=5 // pred_check
      %p300 = pneg %p299
    $region50: #{tpu_custom_call.1} parent=5 // pred_check_branch
      %302 = sbr.rel (%p300) target = $region52
    $region51: #{tpu_custom_call.1} parent=5 // pred_region
      // Predicated region
      $region53: #{tpu_custom_call.1} parent=51 // pred_check
        %p303 = pneg %p36
      $region54: #{tpu_custom_call.1} parent=51 // pred_check_branch
        %305 = sbr.rel (%p303) target = $region56
      $region55: #{tpu_custom_call.1} parent=51 // pred_region
        %p306 = scmp.lt.s32.totalorder %s16, 1
        %s307 = scalar_select %p306, %s16, 1
        %s308 = scalar_lea.vmem %s0, %s307
      $region56: #{tpu_custom_call.1} parent=51 // pred_fallthru
        _
    $region52: #{tpu_custom_call.1} parent=5 // pred_fallthru
      _
    %p309 = scmp.le.s32.totalorder 1, %s16
    %p310 = scmp.lt.s32.totalorder %s16, 3
    %p311 = pnand %p309, %p310
    %p312 = pneg %p311
    // Predicated region
    $region57: #{tpu_custom_call.1} parent=5 // pred_check
      _
    $region58: #{tpu_custom_call.1} parent=5 // pred_check_branch
      %314 = sbr.rel (%p311) target = $region60
    $region59: #{tpu_custom_call.1} parent=5 // pred_region
      %s315 = ssub.s32 %s16, 1
      %p316 = scmp.lt.s32.totalorder %s21, 1
      %s317 = scalar_select %p316, %s21, 1
      %s318 = scalar_lea.vmem %s0, %s317
      %p319 = pneg %p42
      %p320 = pneg %p39
      %p321 = pneg %p63
      %p322 = pneg %p60
      %p323 = pneg %p84
      %p324 = pneg %p81
      %p325 = pneg %p105
      %p326 = pneg %p102
      %p327 = pneg %p126
      %p328 = pneg %p123
      %p329 = pneg %p147
      %p330 = pneg %p144
      %p331 = pneg %p168
      %p332 = pneg %p165
      %p333 = pneg %p189
      %p334 = pneg %p186
      %p335 = pneg %p210
      %p336 = pneg %p207
      %p337 = pneg %p231
      %p338 = pneg %p228
      %p339 = pneg %p257
      %p340 = pneg %p254
      %p341 = scmp.lt.s32.totalorder %s21, 1
      %s342 = scalar_select %p341, %s21, 1
      %s343 = smul.addr %s342, 4
      %s344 = smul.addr %s343, 8
      %s345 = scalar_lea.vmem %s10, %s344
      %p346 = scmp.lt.s32.totalorder %s21, 1
      %s347 = scalar_select %p346, %s21, 1
      %s348 = scalar_lea.vmem %s0, %s347
      %p349 = scmp.lt.s32.totalorder %s21, 1
      %s350 = scalar_select %p349, %s21, 1
      %s351 = smul.addr %s350, 4
      %s352 = smul.addr %s351, 8
      %s353 = scalar_lea.vmem %s10, %s352
      %v354 = vld [vmem:[%s348] sm:$0x1]
      %vm355 = vcmask 1040384
      %v356 = vsel %vm355, %v354, 0.0
      %v358 = vlaneseq
      %v359 = vshrl.u32 %v358, 7
      %v360 = vsub.s32 0, %v359
      %v361 = vrot.slane %v354, %v360
      %v363 = vsel %vm355, 0.0, %v361
      %365 = vrot.lane.b32.xlu0 %v363, 32
      %v366 = vpop.permute.xlu0 %365
      %vm368 = vcmask 261120
      %v369 = vsel %vm368, %v356, %v366
      %v370 = vld [vmem:[%s1] sm:$0xff]
      %v371 = vld [vmem:[%s1 + $0x8] sm:$0xff]
      %v372 = vld [vmem:[%s1 + $0x10] sm:$0xff]
      %v373 = vld [vmem:[%s1 + $0x18] sm:$0xff]
      %v374 = vld [vmem:[%s1 + $0x20] sm:$0xff]
      %v375 = vld [vmem:[%s1 + $0x28] sm:$0xff]
      %v376 = vld [vmem:[%s1 + $0x30] sm:$0xff]
      %v377 = vld [vmem:[%s1 + $0x38] sm:$0xff]
      %vm378 = vcmask 523264
      %v380 = vsel %vm378, %v369, 0
      %382 = vmatprep.subr.mxu0 0.0
      %383 = vmatpush1.msra.mxu0 %v370
      %384 = vmatprep.subr.mxu0 0.0
      %385 = vmatpush1.msra.mxu0 %v371
      %386 = vmatprep.subr.mxu0 0.0
      %387 = vmatpush1.msra.mxu0 %v372
      %388 = vmatprep.subr.mxu0 0.0
      %389 = vmatpush1.msra.mxu0 %v373
      %390 = vmatprep.subr.mxu0 0.0
      %391 = vmatpush1.msra.mxu0 %v374
      %392 = vmatprep.subr.mxu0 0.0
      %393 = vmatpush1.msra.mxu0 %v375
      %394 = vmatprep.subr.mxu0 0.0
      %395 = vmatpush1.msra.mxu0 %v376
      %396 = vmatprep.subr.mxu0 0.0
      %397 = vmatpush1.msra.mxu0 %v377
      %398 = vmatprep.subr.mxu0 0.0
      %399 = vmatpush1.msra.mxu0 0.0
      %400 = vmatprep.subr.mxu0 0.0
      %401 = vmatpush1.msra.mxu0 0.0
      %402 = vmatprep.subr.mxu0 0.0
      %403 = vmatpush1.msra.mxu0 0.0
      %404 = vmatprep.subr.mxu0 0.0
      %405 = vmatpush1.msra.mxu0 0.0
      %406 = vmatprep.subr.mxu0 0.0
      %407 = vmatpush1.msra.mxu0 0.0
      %408 = vmatprep.subr.mxu0 0.0
      %409 = vmatpush1.msra.mxu0 0.0
      %410 = vmatprep.subr.mxu0 0.0
      %411 = vmatpush1.msra.mxu0 0.0
      %412 = vmatprep.subr.mxu0 0.0
      %413 = vmatpush1.msra.mxu0 0.0
      %414 = vmatprep.subr.mxu0 0.0
      %415 = vmatpush1.msra.mxu0 0.0
      %416 = vmatprep.subr.mxu0 0.0
      %417 = vmatpush1.msra.mxu0 0.0
      %418 = vmatprep.subr.mxu0 0.0
      %419 = vmatpush1.msra.mxu0 0.0
      %420 = vmatprep.subr.mxu0 0.0
      %421 = vmatpush1.msra.mxu0 0.0
      %422 = vmatprep.subr.mxu0 0.0
      %423 = vmatpush1.msra.mxu0 0.0
      %424 = vmatprep.subr.mxu0 0.0
      %425 = vmatpush1.msra.mxu0 0.0
      %426 = vmatprep.subr.mxu0 0.0
      %427 = vmatpush1.msra.mxu0 0.0
      %428 = vmatprep.subr.mxu0 0.0
      %429 = vmatpush1.msra.mxu0 0.0
      %430 = vmatprep.subr.mxu0 0.0
      %431 = vmatpush1.msra.mxu0 0.0
      %432 = vmatprep.subr.mxu0 0.0
      %433 = vmatpush1.msra.mxu0 0.0
      %434 = vmatprep.subr.mxu0 0.0
      %435 = vmatpush1.msra.mxu0 0.0
      %436 = vmatprep.subr.mxu0 0.0
      %437 = vmatpush1.msra.mxu0 0.0
      %438 = vmatprep.subr.mxu0 0.0
      %439 = vmatpush1.msra.mxu0 0.0
      %440 = vmatprep.subr.mxu0 0.0
      %441 = vmatpush1.msra.mxu0 0.0
      %442 = vmatprep.subr.mxu0 0.0
      %443 = vmatpush1.msra.mxu0 0.0
      %444 = vmatprep.subr.mxu0 0.0
      %445 = vmatpush1.msra.mxu0 0.0
      %446 = vmatprep.mubr.f32.mxu0 0.0
      %447 = vmatmul.mubr.f32.gmra.mrb[0].mxu0 %v380
      %v448 = vpop.f32.mrb[0].mxu0
      %v449 = vadd.f32 0.0, %v448
      %v450 = vpop.f32.mrb[0].mxu0
      %451 = vdwg.mxu0
      %vm452 = vcmp.ge.f32.partialorder %v449, 0.0
      %v453 = vmul.f32 %v449, 0.2
      %v454 = vsel %vm452, %v449, %v453
      %v455 = vld [vmem:[%s6] sm:$0xf]
      %v456 = vld [vmem:[%s2] sm:$0xff]
      %v457 = vld [vmem:[%s2 + $0x8] sm:$0xff]
      %v458 = vld [vmem:[%s2 + $0x10] sm:$0xff]
      %v459 = vld [vmem:[%s2 + $0x18] sm:$0xff]
      %v460 = vld [vmem:[%s2 + $0x20] sm:$0xff]
      %v461 = vld [vmem:[%s2 + $0x28] sm:$0xff]
      %v462 = vld [vmem:[%s2 + $0x30] sm:$0xff]
      %v463 = vld [vmem:[%s2 + $0x38] sm:$0xff]
      %v464 = vld [vmem:[%s2 + $0x40] sm:$0xff]
      %v465 = vld [vmem:[%s2 + $0x48] sm:$0xff]
      %v466 = vld [vmem:[%s2 + $0x50] sm:$0xff]
      %v467 = vld [vmem:[%s2 + $0x58] sm:$0xff]
      %v468 = vld [vmem:[%s2 + $0x60] sm:$0xff]
      %v469 = vld [vmem:[%s2 + $0x68] sm:$0xff]
      %v470 = vld [vmem:[%s2 + $0x70] sm:$0xff]
      %v471 = vld [vmem:[%s2 + $0x78] sm:$0xff]
      %v472 = vld [vmem:[%s2 + $0x80] sm:$0xff]
      %v473 = vld [vmem:[%s2 + $0x88] sm:$0xff]
      %v474 = vld [vmem:[%s2 + $0x90] sm:$0xff]
      %v475 = vld [vmem:[%s2 + $0x98] sm:$0xff]
      %v476 = vld [vmem:[%s2 + $0xa0] sm:$0xff]
      %v477 = vld [vmem:[%s2 + $0xa8] sm:$0xff]
      %v478 = vld [vmem:[%s2 + $0xb0] sm:$0xff]
      %v479 = vld [vmem:[%s2 + $0xb8] sm:$0xff]
      %vm480 = vcmask 15360
      %v482 = vsel %vm480, %v455, 0
      %vm484 = vcmask 1041408
      %v486 = vsel %vm484, %v454, 0
      %488 = vmatprep.subr.mxu0 0.0
      %489 = vmatpush1.msra.mxu0 %v486
      %490 = vmatprep.subr.mxu0 0.0
      %491 = vmatpush1.msra.mxu0 0.0
      %492 = vmatprep.subr.mxu0 0.0
      %493 = vmatpush1.msra.mxu0 0.0
      %494 = vmatprep.subr.mxu0 0.0
      %495 = vmatpush1.msra.mxu0 0.0
      %496 = vmatprep.subr.mxu0 0.0
      %497 = vmatpush1.msra.mxu0 0.0
      %498 = vmatprep.subr.mxu0 0.0
      %499 = vmatpush1.msra.mxu0 0.0
      %500 = vmatprep.subr.mxu0 0.0
      %501 = vmatpush1.msra.mxu0 0.0
      %502 = vmatprep.subr.mxu0 0.0
      %503 = vmatpush1.msra.mxu0 0.0
      %504 = vmatprep.subr.mxu0 0.0
      %505 = vmatpush1.msra.mxu0 0.0
      %506 = vmatprep.subr.mxu0 0.0
      %507 = vmatpush1.msra.mxu0 0.0
      %508 = vmatprep.subr.mxu0 0.0
      %509 = vmatpush1.msra.mxu0 0.0
      %510 = vmatprep.subr.mxu0 0.0
      %511 = vmatpush1.msra.mxu0 0.0
      %512 = vmatprep.subr.mxu0 0.0
      %513 = vmatpush1.msra.mxu0 0.0
      %514 = vmatprep.subr.mxu0 0.0
      %515 = vmatpush1.msra.mxu0 0.0
      %516 = vmatprep.subr.mxu0 0.0
      %517 = vmatpush1.msra.mxu0 0.0
      %518 = vmatprep.subr.mxu0 0.0
      %519 = vmatpush1.msra.mxu0 0.0
      %520 = vmatprep.subr.mxu0 0.0
      %521 = vmatpush1.msra.mxu0 0.0
      %522 = vmatprep.subr.mxu0 0.0
      %523 = vmatpush1.msra.mxu0 0.0
      %524 = vmatprep.subr.mxu0 0.0
      %525 = vmatpush1.msra.mxu0 0.0
      %526 = vmatprep.subr.mxu0 0.0
      %527 = vmatpush1.msra.mxu0 0.0
      %528 = vmatprep.subr.mxu0 0.0
      %529 = vmatpush1.msra.mxu0 0.0
      %530 = vmatprep.subr.mxu0 0.0
      %531 = vmatpush1.msra.mxu0 0.0
      %532 = vmatprep.subr.mxu0 0.0
      %533 = vmatpush1.msra.mxu0 0.0
      %534 = vmatprep.subr.mxu0 0.0
      %535 = vmatpush1.msra.mxu0 0.0
      %536 = vmatprep.subr.mxu0 0.0
      %537 = vmatpush1.msra.mxu0 0.0
      %538 = vmatprep.subr.mxu0 0.0
      %539 = vmatpush1.msra.mxu0 0.0
      %540 = vmatprep.subr.mxu0 0.0
      %541 = vmatpush1.msra.mxu0 0.0
      %542 = vmatprep.subr.mxu0 0.0
      %543 = vmatpush1.msra.mxu0 0.0
      %544 = vmatprep.subr.mxu0 0.0
      %545 = vmatpush1.msra.mxu0 0.0
      %546 = vmatprep.subr.mxu0 0.0
      %547 = vmatpush1.msra.mxu0 0.0
      %548 = vmatprep.subr.mxu0 0.0
      %549 = vmatpush1.msra.mxu0 0.0
      %550 = vmatprep.subr.mxu0 0.0
      %551 = vmatpush1.msra.mxu0 0.0
      %552 = vmatprep.mubr.f32.mxu0 0.0
      %553 = vmatmul.mubr.f32.gmra.mrb[0].mxu0 %v482
      %v554 = vpop.f32.mrb[0].mxu0
      %v555 = vadd.f32 0.0, %v554
      %v556 = vpop.f32.mrb[0].mxu0
      %557 = vdwg.mxu0
      %v559 = vrot.slane %v555, 7
      %v561 = vsel %vm355, 0.0, %v559
      %v562 = vrot.slane %v555, 1
      %vm564 = vcmask 1042432
      %v565 = vsel %vm564, %v562, 0.0
      %566 = vrot.lane.b32.xlu0 %v555, 64
      %v567 = vpop.permute.xlu0 %566
      %v569 = vsel %vm378, %v561, %v567
      %v571 = vsel %vm378, %v565, 0
      %573 = vmatprep.subr.mxu0 0.0
      %574 = vmatpush1.msra.mxu0 %v456
      %575 = vmatprep.subr.mxu0 0.0
      %576 = vmatpush1.msra.mxu0 %v457
      %577 = vmatprep.subr.mxu0 0.0
      %578 = vmatpush1.msra.mxu0 %v458
      %579 = vmatprep.subr.mxu0 0.0
      %580 = vmatpush1.msra.mxu0 %v459
      %581 = vmatprep.subr.mxu0 0.0
      %582 = vmatpush1.msra.mxu0 %v460
      %583 = vmatprep.subr.mxu0 0.0
      %584 = vmatpush1.msra.mxu0 %v461
      %585 = vmatprep.subr.mxu0 0.0
      %586 = vmatpush1.msra.mxu0 %v462
      %587 = vmatprep.subr.mxu0 0.0
      %588 = vmatpush1.msra.mxu0 %v463
      %589 = vmatprep.subr.mxu0 0.0
      %590 = vmatpush1.msra.mxu0 %v464
      %591 = vmatprep.subr.mxu0 0.0
      %592 = vmatpush1.msra.mxu0 %v465
      %593 = vmatprep.subr.mxu0 0.0
      %594 = vmatpush1.msra.mxu0 %v466
      %595 = vmatprep.subr.mxu0 0.0
      %596 = vmatpush1.msra.mxu0 %v467
      %597 = vmatprep.subr.mxu0 0.0
      %598 = vmatpush1.msra.mxu0 %v468
      %599 = vmatprep.subr.mxu0 0.0
      %600 = vmatpush1.msra.mxu0 %v469
      %601 = vmatprep.subr.mxu0 0.0
      %602 = vmatpush1.msra.mxu0 %v470
      %603 = vmatprep.subr.mxu0 0.0
      %604 = vmatpush1.msra.mxu0 %v471
      %605 = vmatprep.subr.mxu0 0.0
      %606 = vmatpush1.msra.mxu0 %v472
      %607 = vmatprep.subr.mxu0 0.0
      %608 = vmatpush1.msra.mxu0 %v473
      %609 = vmatprep.subr.mxu0 0.0
      %610 = vmatpush1.msra.mxu0 %v474
      %611 = vmatprep.subr.mxu0 0.0
      %612 = vmatpush1.msra.mxu0 %v475
      %613 = vmatprep.subr.mxu0 0.0
      %614 = vmatpush1.msra.mxu0 %v476
      %615 = vmatprep.subr.mxu0 0.0
      %616 = vmatpush1.msra.mxu0 %v477
      %617 = vmatprep.subr.mxu0 0.0
      %618 = vmatpush1.msra.mxu0 %v478
      %619 = vmatprep.subr.mxu0 0.0
      %620 = vmatpush1.msra.mxu0 %v479
      %621 = vmatprep.subr.mxu0 0.0
      %622 = vmatpush1.msra.mxu0 0.0
      %623 = vmatprep.subr.mxu0 0.0
      %624 = vmatpush1.msra.mxu0 0.0
      %625 = vmatprep.subr.mxu0 0.0
      %626 = vmatpush1.msra.mxu0 0.0
      %627 = vmatprep.subr.mxu0 0.0
      %628 = vmatpush1.msra.mxu0 0.0
      %629 = vmatprep.subr.mxu0 0.0
      %630 = vmatpush1.msra.mxu0 0.0
      %631 = vmatprep.subr.mxu0 0.0
      %632 = vmatpush1.msra.mxu0 0.0
      %633 = vmatprep.subr.mxu0 0.0
      %634 = vmatpush1.msra.mxu0 0.0
      %635 = vmatprep.subr.mxu0 0.0
      %636 = vmatpush1.msra.mxu0 0.0
      %637 = vmatprep.mubr.f32.mxu0 %v571
      %638 = vmatmul.mubr.f32.gmra.mrb[0].mxu0 %v569
      %v639 = vpop.f32.mrb[0].mxu0
      %v640 = vadd.f32 0.0, %v639
      %v641 = vpop.f32.mrb[0].mxu0
      %642 = vdwg.mxu0
      %vm643 = vcmp.ge.f32.partialorder %v640, 0.0
      %v644 = vmul.f32 %v640, 0.2
      %v645 = vsel %vm643, %v640, %v644
      %v646 = vld [vmem:[%s7] sm:$0xff]
      %v647 = vld [vmem:[%s3] sm:$0xff]
      %v648 = vld [vmem:[%s3 + $0x8] sm:$0xff]
      %v649 = vld [vmem:[%s3 + $0x10] sm:$0xff]
      %v650 = vld [vmem:[%s3 + $0x18] sm:$0xff]
      %v651 = vld [vmem:[%s3 + $0x20] sm:$0xff]
      %v652 = vld [vmem:[%s3 + $0x28] sm:$0xff]
      %v653 = vld [vmem:[%s3 + $0x30] sm:$0xff]
      %v654 = vld [vmem:[%s3 + $0x38] sm:$0xff]
      %v655 = vld [vmem:[%s3 + $0x40] sm:$0xff]
      %v656 = vld [vmem:[%s3 + $0x48] sm:$0xff]
      %v657 = vld [vmem:[%s3 + $0x50] sm:$0xff]
      %v658 = vld [vmem:[%s3 + $0x58] sm:$0xff]
      %vm659 = vcmask 31744
      %v661 = vsel %vm659, %v646, 0
      %vm663 = vcmask 1043456
      %v665 = vsel %vm663, %v645, 0
      %667 = vmatprep.subr.mxu0 0.0
      %668 = vmatpush1.msra.mxu0 %v665
      %669 = vmatprep.subr.mxu0 0.0
      %670 = vmatpush1.msra.mxu0 0.0
      %671 = vmatprep.subr.mxu0 0.0
      %672 = vmatpush1.msra.mxu0 0.0
      %673 = vmatprep.subr.mxu0 0.0
      %674 = vmatpush1.msra.mxu0 0.0
      %675 = vmatprep.subr.mxu0 0.0
      %676 = vmatpush1.msra.mxu0 0.0
      %677 = vmatprep.subr.mxu0 0.0
      %678 = vmatpush1.msra.mxu0 0.0
      %679 = vmatprep.subr.mxu0 0.0
      %680 = vmatpush1.msra.mxu0 0.0
      %681 = vmatprep.subr.mxu0 0.0
      %682 = vmatpush1.msra.mxu0 0.0
      %683 = vmatprep.subr.mxu0 0.0
      %684 = vmatpush1.msra.mxu0 0.0
      %685 = vmatprep.subr.mxu0 0.0
      %686 = vmatpush1.msra.mxu0 0.0
      %687 = vmatprep.subr.mxu0 0.0
      %688 = vmatpush1.msra.mxu0 0.0
      %689 = vmatprep.subr.mxu0 0.0
      %690 = vmatpush1.msra.mxu0 0.0
      %691 = vmatprep.subr.mxu0 0.0
      %692 = vmatpush1.msra.mxu0 0.0
      %693 = vmatprep.subr.mxu0 0.0
      %694 = vmatpush1.msra.mxu0 0.0
      %695 = vmatprep.subr.mxu0 0.0
      %696 = vmatpush1.msra.mxu0 0.0
      %697 = vmatprep.subr.mxu0 0.0
      %698 = vmatpush1.msra.mxu0 0.0
      %699 = vmatprep.subr.mxu0 0.0
      %700 = vmatpush1.msra.mxu0 0.0
      %701 = vmatprep.subr.mxu0 0.0
      %702 = vmatpush1.msra.mxu0 0.0
      %703 = vmatprep.subr.mxu0 0.0
      %704 = vmatpush1.msra.mxu0 0.0
      %705 = vmatprep.subr.mxu0 0.0
      %706 = vmatpush1.msra.mxu0 0.0
      %707 = vmatprep.subr.mxu0 0.0
      %708 = vmatpush1.msra.mxu0 0.0
      %709 = vmatprep.subr.mxu0 0.0
      %710 = vmatpush1.msra.mxu0 0.0
      %711 = vmatprep.subr.mxu0 0.0
      %712 = vmatpush1.msra.mxu0 0.0
      %713 = vmatprep.subr.mxu0 0.0
      %714 = vmatpush1.msra.mxu0 0.0
      %715 = vmatprep.subr.mxu0 0.0
      %716 = vmatpush1.msra.mxu0 0.0
      %717 = vmatprep.subr.mxu0 0.0
      %718 = vmatpush1.msra.mxu0 0.0
      %719 = vmatprep.subr.mxu0 0.0
      %720 = vmatpush1.msra.mxu0 0.0
      %721 = vmatprep.subr.mxu0 0.0
      %722 = vmatpush1.msra.mxu0 0.0
      %723 = vmatprep.subr.mxu0 0.0
      %724 = vmatpush1.msra.mxu0 0.0
      %725 = vmatprep.subr.mxu0 0.0
      %726 = vmatpush1.msra.mxu0 0.0
      %727 = vmatprep.subr.mxu0 0.0
      %728 = vmatpush1.msra.mxu0 0.0
      %729 = vmatprep.subr.mxu0 0.0
      %730 = vmatpush1.msra.mxu0 0.0
      %731 = vmatprep.mubr.f32.mxu0 0.0
      %732 = vmatmul.mubr.f32.gmra.mrb[0].mxu0 %v661
      %v733 = vpop.f32.mrb[0].mxu0
      %v734 = vadd.f32 0.0, %v733
      %v735 = vpop.f32.mrb[0].mxu0
      %736 = vdwg.mxu0
      %v738 = vrot.slane %v734, 7
      %v740 = vsel %vm355, 0.0, %v738
      %v741 = vrot.slane %v734, 1
      %vm743 = vcmask 1046528
      %v744 = vsel %vm743, %v741, 0.0
      %745 = vrot.lane.b32.xlu0 %v734, 32
      %v746 = vpop.permute.xlu0 %745
      %749 = vrot.lane.b32.xlu0 %v744, 64
      %v750 = vpop.permute.xlu0 %749
      %v752 = vsel %vm368, %v740, %v746
      %v753 = vsel %vm378, %v752, %v750
      %vm754 = vcmask 785408
      %v756 = vsel %vm754, %v753, 0
      %758 = vmatprep.subr.mxu0 0.0
      %759 = vmatpush1.msra.mxu0 %v647
      %760 = vmatprep.subr.mxu0 0.0
      %761 = vmatpush1.msra.mxu0 %v648
      %762 = vmatprep.subr.mxu0 0.0
      %763 = vmatpush1.msra.mxu0 %v649
      %764 = vmatprep.subr.mxu0 0.0
      %765 = vmatpush1.msra.mxu0 %v650
      %766 = vmatprep.subr.mxu0 0.0
      %767 = vmatpush1.msra.mxu0 %v651
      %768 = vmatprep.subr.mxu0 0.0
      %769 = vmatpush1.msra.mxu0 %v652
      %770 = vmatprep.subr.mxu0 0.0
      %771 = vmatpush1.msra.mxu0 %v653
      %772 = vmatprep.subr.mxu0 0.0
      %773 = vmatpush1.msra.mxu0 %v654
      %774 = vmatprep.subr.mxu0 0.0
      %775 = vmatpush1.msra.mxu0 %v655
      %776 = vmatprep.subr.mxu0 0.0
      %777 = vmatpush1.msra.mxu0 %v656
      %778 = vmatprep.subr.mxu0 0.0
      %779 = vmatpush1.msra.mxu0 %v657
      %780 = vmatprep.subr.mxu0 0.0
      %781 = vmatpush1.msra.mxu0 %v658
      %782 = vmatprep.subr.mxu0 0.0
      %783 = vmatpush1.msra.mxu0 0.0
      %784 = vmatprep.subr.mxu0 0.0
      %785 = vmatpush1.msra.mxu0 0.0
      %786 = vmatprep.subr.mxu0 0.0
      %787 = vmatpush1.msra.mxu0 0.0
      %788 = vmatprep.subr.mxu0 0.0
      %789 = vmatpush1.msra.mxu0 0.0
      %790 = vmatprep.subr.mxu0 0.0
      %791 = vmatpush1.msra.mxu0 0.0
      %792 = vmatprep.subr.mxu0 0.0
      %793 = vmatpush1.msra.mxu0 0.0
      %794 = vmatprep.subr.mxu0 0.0
      %795 = vmatpush1.msra.mxu0 0.0
      %796 = vmatprep.subr.mxu0 0.0
      %797 = vmatpush1.msra.mxu0 0.0
      %798 = vmatprep.subr.mxu0 0.0
      %799 = vmatpush1.msra.mxu0 0.0
      %800 = vmatprep.subr.mxu0 0.0
      %801 = vmatpush1.msra.mxu0 0.0
      %802 = vmatprep.subr.mxu0 0.0
      %803 = vmatpush1.msra.mxu0 0.0
      %804 = vmatprep.subr.mxu0 0.0
      %805 = vmatpush1.msra.mxu0 0.0
      %806 = vmatprep.subr.mxu0 0.0
      %807 = vmatpush1.msra.mxu0 0.0
      %808 = vmatprep.subr.mxu0 0.0
      %809 = vmatpush1.msra.mxu0 0.0
      %810 = vmatprep.subr.mxu0 0.0
      %811 = vmatpush1.msra.mxu0 0.0
      %812 = vmatprep.subr.mxu0 0.0
      %813 = vmatpush1.msra.mxu0 0.0
      %814 = vmatprep.subr.mxu0 0.0
      %815 = vmatpush1.msra.mxu0 0.0
      %816 = vmatprep.subr.mxu0 0.0
      %817 = vmatpush1.msra.mxu0 0.0
      %818 = vmatprep.subr.mxu0 0.0
      %819 = vmatpush1.msra.mxu0 0.0
      %820 = vmatprep.subr.mxu0 0.0
      %821 = vmatpush1.msra.mxu0 0.0
      %822 = vmatprep.mubr.f32.mxu0 0.0
      %823 = vmatmul.mubr.f32.gmra.mrb[0].mxu0 %v756
      %v824 = vpop.f32.mrb[0].mxu0
      %v825 = vadd.f32 0.0, %v824
      %v826 = vpop.f32.mrb[0].mxu0
      %827 = vdwg.mxu0
      %vm828 = vcmp.ge.f32.partialorder %v825, 0.0
      %v829 = vmul.f32 %v825, 0.2
      %v830 = vsel %vm828, %v825, %v829
      %v831 = vld [vmem:[%s8] sm:$0xff]
      %v832 = vld [vmem:[%s8 + $0x8] sm:$0xff]
      %v833 = vld [vmem:[%s4] sm:$0xff]
      %v834 = vld [vmem:[%s4 + $0x8] sm:$0xff]
      %v835 = vld [vmem:[%s4 + $0x10] sm:$0xff]
      %v836 = vld [vmem:[%s4 + $0x18] sm:$0xff]
      %v837 = vld [vmem:[%s4 + $0x20] sm:$0xff]
      %v838 = vld [vmem:[%s4 + $0x28] sm:$0xff]
      %vm839 = vcmask 64512
      %v841 = vsel %vm839, %v831, 0
      %v844 = vsel %vm839, %v832, 0
      %846 = vmatprep.subr.mxu0 0.0
      %847 = vmatpush1.msra.mxu0 %v830
      %848 = vmatprep.subr.mxu0 0.0
      %849 = vmatpush1.msra.mxu0 0.0
      %850 = vmatprep.subr.mxu0 0.0
      %851 = vmatpush1.msra.mxu0 0.0
      %852 = vmatprep.subr.mxu0 0.0
      %853 = vmatpush1.msra.mxu0 0.0
      %854 = vmatprep.subr.mxu0 0.0
      %855 = vmatpush1.msra.mxu0 0.0
      %856 = vmatprep.subr.mxu0 0.0
      %857 = vmatpush1.msra.mxu0 0.0
      %858 = vmatprep.subr.mxu0 0.0
      %859 = vmatpush1.msra.mxu0 0.0
      %860 = vmatprep.subr.mxu0 0.0
      %861 = vmatpush1.msra.mxu0 0.0
      %862 = vmatprep.subr.mxu0 0.0
      %863 = vmatpush1.msra.mxu0 0.0
      %864 = vmatprep.subr.mxu0 0.0
      %865 = vmatpush1.msra.mxu0 0.0
      %866 = vmatprep.subr.mxu0 0.0
      %867 = vmatpush1.msra.mxu0 0.0
      %868 = vmatprep.subr.mxu0 0.0
      %869 = vmatpush1.msra.mxu0 0.0
      %870 = vmatprep.subr.mxu0 0.0
      %871 = vmatpush1.msra.mxu0 0.0
      %872 = vmatprep.subr.mxu0 0.0
      %873 = vmatpush1.msra.mxu0 0.0
      %874 = vmatprep.subr.mxu0 0.0
      %875 = vmatpush1.msra.mxu0 0.0
      %876 = vmatprep.subr.mxu0 0.0
      %877 = vmatpush1.msra.mxu0 0.0
      %878 = vmatprep.subr.mxu0 0.0
      %879 = vmatpush1.msra.mxu0 0.0
      %880 = vmatprep.subr.mxu0 0.0
      %881 = vmatpush1.msra.mxu0 0.0
      %882 = vmatprep.subr.mxu0 0.0
      %883 = vmatpush1.msra.mxu0 0.0
      %884 = vmatprep.subr.mxu0 0.0
      %885 = vmatpush1.msra.mxu0 0.0
      %886 = vmatprep.subr.mxu0 0.0
      %887 = vmatpush1.msra.mxu0 0.0
      %888 = vmatprep.subr.mxu0 0.0
      %889 = vmatpush1.msra.mxu0 0.0
      %890 = vmatprep.subr.mxu0 0.0
      %891 = vmatpush1.msra.mxu0 0.0
      %892 = vmatprep.subr.mxu0 0.0
      %893 = vmatpush1.msra.mxu0 0.0
      %894 = vmatprep.subr.mxu0 0.0
      %895 = vmatpush1.msra.mxu0 0.0
      %896 = vmatprep.subr.mxu0 0.0
      %897 = vmatpush1.msra.mxu0 0.0
      %898 = vmatprep.subr.mxu0 0.0
      %899 = vmatpush1.msra.mxu0 0.0
      %900 = vmatprep.subr.mxu0 0.0
      %901 = vmatpush1.msra.mxu0 0.0
      %902 = vmatprep.subr.mxu0 0.0
      %903 = vmatpush1.msra.mxu0 0.0
      %904 = vmatprep.subr.mxu0 0.0
      %905 = vmatpush1.msra.mxu0 0.0
      %906 = vmatprep.subr.mxu0 0.0
      %907 = vmatpush1.msra.mxu0 0.0
      %908 = vmatprep.subr.mxu0 0.0
      %909 = vmatpush1.msra.mxu0 0.0
      %910 = vmatprep.mubr.f32.mxu0 0.0
      %911 = vmatmul.mubr.f32.gmra.mrb[0].mxu0 %v841
      %v912 = vpop.f32.mrb[0].mxu0
      %v913 = vadd.f32 0.0, %v912
      %v914 = vpop.f32.mrb[0].mxu0
      %915 = vmatprep.mubr.f32.mxu0 0.0
      %916 = vmatmul.mubr.f32.gmra.mrb[0].mxu0 %v844
      %v917 = vpop.f32.mrb[0].mxu0
      %v918 = vadd.f32 0.0, %v917
      %v919 = vpop.f32.mrb[0].mxu0
      %920 = vdwg.mxu0
      %v923 = vrot.slane %v913, 7
      %v924 = vrot.slane %v918, 7
      %v925 = vsel %vm355, %v923, %v924
      %v928 = vsel %vm355, 0.0, %v923
      %v929 = vrot.slane %v913, 1
      %v930 = vrot.slane %v918, 1
      %v931 = vsel %vm743, %v929, %v930
      %v933 = vsel %vm743, %v930, 0.0
      %934 = vrot.lane.b32.xlu0 %v913, 16
      %v935 = vpop.permute.xlu0 %934
      %936 = vrot.lane.b32.xlu0 %v918, 16
      %v937 = vpop.permute.xlu0 %936
      %941 = vrot.lane.b32.xlu0 %v931, 32
      %v942 = vpop.permute.xlu0 %941
      %943 = vrot.lane.b32.xlu0 %v933, 32
      %v944 = vpop.permute.xlu0 %943
      %vm947 = vcmask 130048
      %v948 = vsel %vm947, %v928, %v935
      %v949 = vsel %vm947, %v925, %v937
      %v950 = vsel %vm368, %v948, %v942
      %v951 = vsel %vm368, %v949, %v944
      %vm952 = vcmask 392192
      %v954 = vsel %vm952, %v950, 0
      %v957 = vsel %vm952, %v951, 0
      %959 = vmatprep.subr.mxu0 0.0
      %960 = vmatpush1.msra.mxu0 %v833
      %961 = vmatprep.subr.mxu0 0.0
      %962 = vmatpush1.msra.mxu0 %v834
      %963 = vmatprep.subr.mxu0 0.0
      %964 = vmatpush1.msra.mxu0 %v835
      %965 = vmatprep.subr.mxu0 0.0
      %966 = vmatpush1.msra.mxu0 %v836
      %967 = vmatprep.subr.mxu0 0.0
      %968 = vmatpush1.msra.mxu0 %v837
      %969 = vmatprep.subr.mxu0 0.0
      %970 = vmatpush1.msra.mxu0 %v838
      %971 = vmatprep.subr.mxu0 0.0
      %972 = vmatpush1.msra.mxu0 0.0
      %973 = vmatprep.subr.mxu0 0.0
      %974 = vmatpush1.msra.mxu0 0.0
      %975 = vmatprep.subr.mxu0 0.0
      %976 = vmatpush1.msra.mxu0 0.0
      %977 = vmatprep.subr.mxu0 0.0
      %978 = vmatpush1.msra.mxu0 0.0
      %979 = vmatprep.subr.mxu0 0.0
      %980 = vmatpush1.msra.mxu0 0.0
      %981 = vmatprep.subr.mxu0 0.0
      %982 = vmatpush1.msra.mxu0 0.0
      %983 = vmatprep.subr.mxu0 0.0
      %984 = vmatpush1.msra.mxu0 0.0
      %985 = vmatprep.subr.mxu0 0.0
      %986 = vmatpush1.msra.mxu0 0.0
      %987 = vmatprep.subr.mxu0 0.0
      %988 = vmatpush1.msra.mxu0 0.0
      %989 = vmatprep.subr.mxu0 0.0
      %990 = vmatpush1.msra.mxu0 0.0
      %991 = vmatprep.subr.mxu0 0.0
      %992 = vmatpush1.msra.mxu0 0.0
      %993 = vmatprep.subr.mxu0 0.0
      %994 = vmatpush1.msra.mxu0 0.0
      %995 = vmatprep.subr.mxu0 0.0
      %996 = vmatpush1.msra.mxu0 0.0
      %997 = vmatprep.subr.mxu0 0.0
      %998 = vmatpush1.msra.mxu0 0.0
      %999 = vmatprep.subr.mxu0 0.0
      %1000 = vmatpush1.msra.mxu0 0.0
      %1001 = vmatprep.subr.mxu0 0.0
      %1002 = vmatpush1.msra.mxu0 0.0
      %1003 = vmatprep.subr.mxu0 0.0
      %1004 = vmatpush1.msra.mxu0 0.0
      %1005 = vmatprep.subr.mxu0 0.0
      %1006 = vmatpush1.msra.mxu0 0.0
      %1007 = vmatprep.subr.mxu0 0.0
      %1008 = vmatpush1.msra.mxu0 0.0
      %1009 = vmatprep.subr.mxu0 0.0
      %1010 = vmatpush1.msra.mxu0 0.0
      %1011 = vmatprep.subr.mxu0 0.0
      %1012 = vmatpush1.msra.mxu0 0.0
      %1013 = vmatprep.subr.mxu0 0.0
      %1014 = vmatpush1.msra.mxu0 0.0
      %1015 = vmatprep.subr.mxu0 0.0
      %1016 = vmatpush1.msra.mxu0 0.0
      %1017 = vmatprep.subr.mxu0 0.0
      %1018 = vmatpush1.msra.mxu0 0.0
      %1019 = vmatprep.subr.mxu0 0.0
      %1020 = vmatpush1.msra.mxu0 0.0
      %1021 = vmatprep.subr.mxu0 0.0
      %1022 = vmatpush1.msra.mxu0 0.0
      %1023 = vmatprep.mubr.f32.mxu0 0.0
      %1024 = vmatmul.mubr.f32.gmra.mrb[0].mxu0 %v954
      %v1025 = vpop.f32.mrb[0].mxu0
      %v1026 = vadd.f32 0.0, %v1025
      %v1027 = vpop.f32.mrb[0].mxu0
      %1028 = vmatprep.mubr.f32.mxu0 0.0
      %1029 = vmatmul.mubr.f32.gmra.mrb[0].mxu0 %v957
      %v1030 = vpop.f32.mrb[0].mxu0
      %v1031 = vadd.f32 0.0, %v1030
      %v1032 = vpop.f32.mrb[0].mxu0
      %1033 = vdwg.mxu0
      %vm1034 = vcmp.ge.f32.partialorder %v1026, 0.0
      %vm1035 = vcmp.ge.f32.partialorder %v1031, 0.0
      %v1036 = vmul.f32 %v1026, 0.2
      %v1037 = vmul.f32 %v1031, 0.2
      %v1038 = vsel %vm1034, %v1026, %v1036
      %v1039 = vsel %vm1035, %v1031, %v1037
      %v1040 = vld [vmem:[%s9] sm:$0xff]
      %v1041 = vld [vmem:[%s9 + $0x8] sm:$0xff]
      %v1042 = vld [vmem:[%s9 + $0x10] sm:$0xff]
      %v1043 = vld [vmem:[%s9 + $0x18] sm:$0xff]
      %v1044 = vld [vmem:[%s5] sm:$0xff]
      %v1045 = vld [vmem:[%s5 + $0x8] sm:$0xff]
      %v1046 = vld [vmem:[%s5 + $0x10] sm:$0xff]
      %v1048 = vsel %vm947, %v1040, 0
      %v1051 = vsel %vm947, %v1041, 0
      %v1054 = vsel %vm947, %v1042, 0
      %v1057 = vsel %vm947, %v1043, 0
      %1059 = vmatprep.subr.mxu0 0.0
      %1060 = vmatpush1.msra.mxu0 %v1038
      %1061 = vmatprep.subr.mxu0 0.0
      %1062 = vmatpush1.msra.mxu0 %v1039
      %1063 = vmatprep.subr.mxu0 0.0
      %1064 = vmatpush1.msra.mxu0 0.0
      %1065 = vmatprep.subr.mxu0 0.0
      %1066 = vmatpush1.msra.mxu0 0.0
      %1067 = vmatprep.subr.mxu0 0.0
      %1068 = vmatpush1.msra.mxu0 0.0
      %1069 = vmatprep.subr.mxu0 0.0
      %1070 = vmatpush1.msra.mxu0 0.0
      %1071 = vmatprep.subr.mxu0 0.0
      %1072 = vmatpush1.msra.mxu0 0.0
      %1073 = vmatprep.subr.mxu0 0.0
      %1074 = vmatpush1.msra.mxu0 0.0
      %1075 = vmatprep.subr.mxu0 0.0
      %1076 = vmatpush1.msra.mxu0 0.0
      %1077 = vmatprep.subr.mxu0 0.0
      %1078 = vmatpush1.msra.mxu0 0.0
      %1079 = vmatprep.subr.mxu0 0.0
      %1080 = vmatpush1.msra.mxu0 0.0
      %1081 = vmatprep.subr.mxu0 0.0
      %1082 = vmatpush1.msra.mxu0 0.0
      %1083 = vmatprep.subr.mxu0 0.0
      %1084 = vmatpush1.msra.mxu0 0.0
      %1085 = vmatprep.subr.mxu0 0.0
      %1086 = vmatpush1.msra.mxu0 0.0
      %1087 = vmatprep.subr.mxu0 0.0
      %1088 = vmatpush1.msra.mxu0 0.0
      %1089 = vmatprep.subr.mxu0 0.0
      %1090 = vmatpush1.msra.mxu0 0.0
      %1091 = vmatprep.subr.mxu0 0.0
      %1092 = vmatpush1.msra.mxu0 0.0
      %1093 = vmatprep.subr.mxu0 0.0
      %1094 = vmatpush1.msra.mxu0 0.0
      %1095 = vmatprep.subr.mxu0 0.0
      %1096 = vmatpush1.msra.mxu0 0.0
      %1097 = vmatprep.subr.mxu0 0.0
      %1098 = vmatpush1.msra.mxu0 0.0
      %1099 = vmatprep.subr.mxu0 0.0
      %1100 = vmatpush1.msra.mxu0 0.0
      %1101 = vmatprep.subr.mxu0 0.0
      %1102 = vmatpush1.msra.mxu0 0.0
      %1103 = vmatprep.subr.mxu0 0.0
      %1104 = vmatpush1.msra.mxu0 0.0
      %1105 = vmatprep.subr.mxu0 0.0
      %1106 = vmatpush1.msra.mxu0 0.0
      %1107 = vmatprep.subr.mxu0 0.0
      %1108 = vmatpush1.msra.mxu0 0.0
      %1109 = vmatprep.subr.mxu0 0.0
      %1110 = vmatpush1.msra.mxu0 0.0
      %1111 = vmatprep.subr.mxu0 0.0
      %1112 = vmatpush1.msra.mxu0 0.0
      %1113 = vmatprep.subr.mxu0 0.0
      %1114 = vmatpush1.msra.mxu0 0.0
      %1115 = vmatprep.subr.mxu0 0.0
      %1116 = vmatpush1.msra.mxu0 0.0
      %1117 = vmatprep.subr.mxu0 0.0
      %1118 = vmatpush1.msra.mxu0 0.0
      %1119 = vmatprep.subr.mxu0 0.0
      %1120 = vmatpush1.msra.mxu0 0.0
      %1121 = vmatprep.subr.mxu0 0.0
      %1122 = vmatpush1.msra.mxu0 0.0
      %1123 = vmatprep.mubr.f32.mxu0 0.0
      %1124 = vmatmul.mubr.f32.gmra.mrb[0].mxu0 %v1048
      %v1125 = vpop.f32.mrb[0].mxu0
      %v1126 = vadd.f32 0.0, %v1125
      %v1127 = vpop.f32.mrb[0].mxu0
      %1128 = vmatprep.mubr.f32.mxu0 0.0
      %1129 = vmatmul.mubr.f32.gmra.mrb[0].mxu0 %v1051
      %v1130 = vpop.f32.mrb[0].mxu0
      %v1131 = vadd.f32 0.0, %v1130
      %v1132 = vpop.f32.mrb[0].mxu0
      %1133 = vmatprep.mubr.f32.mxu0 0.0
      %1134 = vmatmul.mubr.f32.gmra.mrb[0].mxu0 %v1054
      %v1135 = vpop.f32.mrb[0].mxu0
      %v1136 = vadd.f32 0.0, %v1135
      %v1137 = vpop.f32.mrb[0].mxu0
      %1138 = vmatprep.mubr.f32.mxu0 0.0
      %1139 = vmatmul.mubr.f32.gmra.mrb[0].mxu0 %v1057
      %v1140 = vpop.f32.mrb[0].mxu0
      %v1141 = vadd.f32 0.0, %v1140
      %v1142 = vpop.f32.mrb[0].mxu0
      %1143 = vdwg.mxu0
      %v1148 = vrot.slane %v1126, 7
      %v1149 = vrot.slane %v1131, 7
      %v1150 = vsel %vm355, %v1148, %v1149
      %v1151 = vrot.slane %v1136, 7
      %v1152 = vsel %vm355, %v1149, %v1151
      %v1153 = vrot.slane %v1141, 7
      %v1154 = vsel %vm355, %v1151, %v1153
      %v1159 = vsel %vm355, 0.0, %v1148
      %v1160 = vrot.slane %v1126, 1
      %v1161 = vrot.slane %v1131, 1
      %v1162 = vsel %vm743, %v1160, %v1161
      %v1163 = vrot.slane %v1136, 1
      %v1164 = vsel %vm743, %v1161, %v1163
      %v1165 = vrot.slane %v1141, 1
      %v1166 = vsel %vm743, %v1163, %v1165
      %v1168 = vsel %vm743, %v1165, 0.0
      %1169 = vrot.lane.b32.xlu0 %v1126, 8
      %v1170 = vpop.permute.xlu0 %1169
      %1171 = vrot.lane.b32.xlu0 %v1131, 8
      %v1172 = vpop.permute.xlu0 %1171
      %1173 = vrot.lane.b32.xlu0 %v1136, 8
      %v1174 = vpop.permute.xlu0 %1173
      %1175 = vrot.lane.b32.xlu0 %v1141, 8
      %v1176 = vpop.permute.xlu0 %1175
      %1182 = vrot.lane.b32.xlu0 %v1162, 16
      %v1183 = vpop.permute.xlu0 %1182
      %1184 = vrot.lane.b32.xlu0 %v1164, 16
      %v1185 = vpop.permute.xlu0 %1184
      %1186 = vrot.lane.b32.xlu0 %v1166, 16
      %v1187 = vpop.permute.xlu0 %1186
      %1188 = vrot.lane.b32.xlu0 %v1168, 16
      %v1189 = vpop.permute.xlu0 %1188
      %v1194 = vsel %vm839, %v1159, %v1170
      %v1195 = vsel %vm839, %v1150, %v1172
      %v1196 = vsel %vm839, %v1152, %v1174
      %v1197 = vsel %vm839, %v1154, %v1176
      %v1198 = vsel %vm947, %v1194, %v1183
      %v1199 = vsel %vm947, %v1195, %v1185
      %v1200 = vsel %vm947, %v1196, %v1187
      %v1201 = vsel %vm947, %v1197, %v1189
      %vm1202 = vcmask 195584
      %v1204 = vsel %vm1202, %v1198, 0
      %v1207 = vsel %vm1202, %v1199, 0
      %v1210 = vsel %vm1202, %v1200, 0
      %v1213 = vsel %vm1202, %v1201, 0
      %1215 = vmatprep.subr.mxu0 0.0
      %1216 = vmatpush1.msra.mxu0 %v1044
      %1217 = vmatprep.subr.mxu0 0.0
      %1218 = vmatpush1.msra.mxu0 %v1045
      %1219 = vmatprep.subr.mxu0 0.0
      %1220 = vmatpush1.msra.mxu0 %v1046
      %1221 = vmatprep.subr.mxu0 0.0
      %1222 = vmatpush1.msra.mxu0 0.0
      %1223 = vmatprep.subr.mxu0 0.0
      %1224 = vmatpush1.msra.mxu0 0.0
      %1225 = vmatprep.subr.mxu0 0.0
      %1226 = vmatpush1.msra.mxu0 0.0
      %1227 = vmatprep.subr.mxu0 0.0
      %1228 = vmatpush1.msra.mxu0 0.0
      %1229 = vmatprep.subr.mxu0 0.0
      %1230 = vmatpush1.msra.mxu0 0.0
      %1231 = vmatprep.subr.mxu0 0.0
      %1232 = vmatpush1.msra.mxu0 0.0
      %1233 = vmatprep.subr.mxu0 0.0
      %1234 = vmatpush1.msra.mxu0 0.0
      %1235 = vmatprep.subr.mxu0 0.0
      %1236 = vmatpush1.msra.mxu0 0.0
      %1237 = vmatprep.subr.mxu0 0.0
      %1238 = vmatpush1.msra.mxu0 0.0
      %1239 = vmatprep.subr.mxu0 0.0
      %1240 = vmatpush1.msra.mxu0 0.0
      %1241 = vmatprep.subr.mxu0 0.0
      %1242 = vmatpush1.msra.mxu0 0.0
      %1243 = vmatprep.subr.mxu0 0.0
      %1244 = vmatpush1.msra.mxu0 0.0
      %1245 = vmatprep.subr.mxu0 0.0
      %1246 = vmatpush1.msra.mxu0 0.0
      %1247 = vmatprep.subr.mxu0 0.0
      %1248 = vmatpush1.msra.mxu0 0.0
      %1249 = vmatprep.subr.mxu0 0.0
      %1250 = vmatpush1.msra.mxu0 0.0
      %1251 = vmatprep.subr.mxu0 0.0
      %1252 = vmatpush1.msra.mxu0 0.0
      %1253 = vmatprep.subr.mxu0 0.0
      %1254 = vmatpush1.msra.mxu0 0.0
      %1255 = vmatprep.subr.mxu0 0.0
      %1256 = vmatpush1.msra.mxu0 0.0
      %1257 = vmatprep.subr.mxu0 0.0
      %1258 = vmatpush1.msra.mxu0 0.0
      %1259 = vmatprep.subr.mxu0 0.0
      %1260 = vmatpush1.msra.mxu0 0.0
      %1261 = vmatprep.subr.mxu0 0.0
      %1262 = vmatpush1.msra.mxu0 0.0
      %1263 = vmatprep.subr.mxu0 0.0
      %1264 = vmatpush1.msra.mxu0 0.0
      %1265 = vmatprep.subr.mxu0 0.0
      %1266 = vmatpush1.msra.mxu0 0.0
      %1267 = vmatprep.subr.mxu0 0.0
      %1268 = vmatpush1.msra.mxu0 0.0
      %1269 = vmatprep.subr.mxu0 0.0
      %1270 = vmatpush1.msra.mxu0 0.0
      %1271 = vmatprep.subr.mxu0 0.0
      %1272 = vmatpush1.msra.mxu0 0.0
      %1273 = vmatprep.subr.mxu0 0.0
      %1274 = vmatpush1.msra.mxu0 0.0
      %1275 = vmatprep.subr.mxu0 0.0
      %1276 = vmatpush1.msra.mxu0 0.0
      %1277 = vmatprep.subr.mxu0 0.0
      %1278 = vmatpush1.msra.mxu0 0.0
      %1279 = vmatprep.mubr.f32.mxu0 0.0
      %1280 = vmatmul.mubr.f32.gmra.mrb[0].mxu0 %v1204
      %v1281 = vpop.f32.mrb[0].mxu0
      %v1282 = vadd.f32 0.0, %v1281
      %v1283 = vpop.f32.mrb[0].mxu0
      %1284 = vmatprep.mubr.f32.mxu0 0.0
      %1285 = vmatmul.mubr.f32.gmra.mrb[0].mxu0 %v1207
      %v1286 = vpop.f32.mrb[0].mxu0
      %v1287 = vadd.f32 0.0, %v1286
      %v1288 = vpop.f32.mrb[0].mxu0
      %1289 = vmatprep.mubr.f32.mxu0 0.0
      %1290 = vmatmul.mubr.f32.gmra.mrb[0].mxu0 %v1210
      %v1291 = vpop.f32.mrb[0].mxu0
      %v1292 = vadd.f32 0.0, %v1291
      %v1293 = vpop.f32.mrb[0].mxu0
      %1294 = vmatprep.mubr.f32.mxu0 0.0
      %1295 = vmatmul.mubr.f32.gmra.mrb[0].mxu0 %v1213
      %v1296 = vpop.f32.mrb[0].mxu0
      %v1297 = vadd.f32 0.0, %v1296
      %v1298 = vpop.f32.mrb[0].mxu0
      %1299 = vdwg.mxu0
      %v1300 = vtanh.pop %v1282
      %v1301 = vtanh.pop %v1287
      %v1302 = vtanh.pop %v1292
      %v1303 = vtanh.pop %v1297
      %1304 = vst.msk [vmem:[%s353] sm:$0xff] %vm480, %v1300
      %1305 = vst.msk [vmem:[%s353 + $0x8] sm:$0xff] %vm480, %v1301
      %1306 = vst.msk [vmem:[%s353 + $0x10] sm:$0xff] %vm480, %v1302
      %1307 = vst.msk [vmem:[%s353 + $0x18] sm:$0xff] %vm480, %v1303
      %p1308 = scmp.lt.s32.totalorder %s21, 1
      %s1309 = scalar_select %p1308, %s21, 1
      %s1310 = smul.addr %s1309, 4
      %s1311 = smul.addr %s1310, 8
      %s1312 = scalar_lea.vmem %s10, %s1311
      // Predicated region
      $region61: #{tpu_custom_call.1} parent=59 // pred_check
        %p1313 = pneg %p254
      $region62: #{tpu_custom_call.1} parent=59 // pred_check_branch
        %1315 = sbr.rel (%p1313) target = $region64
      $region63: #{tpu_custom_call.1} parent=59 // pred_region
        _
      $region64: #{tpu_custom_call.1} parent=59 // pred_fallthru
        _
    $region60: #{tpu_custom_call.1} parent=5 // pred_fallthru
      _
    %p1316 = scmp.le.s32.totalorder 2, %s16
    // Predicated region
    $region65: #{tpu_custom_call.1} parent=5 // pred_check
      %p1317 = pneg %p1316
    $region66: #{tpu_custom_call.1} parent=5 // pred_check_branch
      %1319 = sbr.rel (%p1317) target = $region68
    $region67: #{tpu_custom_call.1} parent=5 // pred_region
      %s1320 = ssub.s32 %s16, 2
      // Predicated region
      $region69: #{tpu_custom_call.1} parent=67 // pred_check
        %p1321 = pneg %p260
      $region70: #{tpu_custom_call.1} parent=67 // pred_check_branch
        %1323 = sbr.rel (%p1321) target = $region72
      $region71: #{tpu_custom_call.1} parent=67 // pred_region
        %p1324 = scmp.lt.s32.totalorder %s22, 1
        %s1325 = scalar_select %p1324, %s22, 1
        %s1326 = smul.addr %s1325, 4
        %s1327 = smul.addr %s1326, 8
        %s1328 = scalar_lea.vmem %s10, %s1327
      $region72: #{tpu_custom_call.1} parent=67 // pred_fallthru
        _
    $region68: #{tpu_custom_call.1} parent=5 // pred_fallthru
      _
  $region6: #{tpu_custom_call.1} parent=0 // loop_footer
    %s20 = sadd.s32 1, %s16
  $region7: #{tpu_custom_call.1} parent=0 // loop_footer_branch
    %15 = sbr.rel target = $region3
  $region8: #{tpu_custom_call.1} parent=0 // loop_exit
    _

</llo_original>
